<compile_context>
chip_gen: v7x
topology: tpu7x:2x2x1
jax: 0.10.0
libtpu: 0.0.40
codegen_flags: <defaults>
</compile_context>

<pallas_src>
from functools import partial

import jax
import jax.numpy as jnp
from jax.experimental import pallas as pl
from jax.experimental.pallas import tpu as pltpu


LANE = 128
VMEM_LIMIT = 64 * 1024 * 1024


def _pick_tile(total, candidates):
    """Largest candidate tile that divides `total`, else the full extent."""
    for c in candidates:
        if total % c == 0:
            return c
    return total


def _pad_lane(arr, n_pad, value=0.0):
    """Pad the last (lane) axis of [B, N] to n_pad."""
    b, n = arr.shape
    if n == n_pad:
        return arr
    return jnp.concatenate([arr, jnp.full((b, n_pad - n), value, arr.dtype)], axis=1)


def _bilinear_corners(ity, ilx, dy, dx, H, W):
    """The 4 bilinear corners of fractional (y, x) positions.

    ity/ilx: [1, N] int32 floor coordinates; dy/dx: [1, N] f32 fractional parts.
    Returns [(int32 pixel index, f32 weight)] where the weight already carries the
    in-bounds mask, so out-of-bounds corners contribute exactly zero.
    """
    out = []
    for oy, wy_ in ((0, 1.0 - dy), (1, dy)):
        for ox, wx_ in ((0, 1.0 - dx), (1, dx)):
            cy = ity + oy
            cx = ilx + ox
            inb = ((cy >= 0) & (cy <= H - 1) & (cx >= 0) & (cx <= W - 1)).astype(jnp.float32)
            out.append((cy * W + cx, wy_ * wx_ * inb))
    return out


# --------------------------------------------------------------------------------------
# Pallas kernels
# --------------------------------------------------------------------------------------
def _sample_flow_kernel(flow2_ref, evy_ref, evx_ref, out_ref, *, H, W):
    """Bilinear sampling of a flow map at fractional event locations (get_event_flow).

    flow2_ref : [1, 2, P]   row 0 = y-flow, row 1 = x-flow (resident across event tiles)
    evy/evx   : [1, 1, Nt]  event coordinates (tile of events, lane-dense)
    out_ref   : [1, 2, Nt]  row 0 = sampled y-flow, row 1 = sampled x-flow
    """
    P = H * W
    flow2 = flow2_ref[0].astype(jnp.bfloat16)            # [2, P]
    y = evy_ref[0]                                       # [1, Nt]
    x = evx_ref[0]
    n = y.shape[-1]

    ty = jnp.floor(y)
    lx = jnp.floor(x)
    dy = y - ty
    dx = x - lx
    ity = ty.astype(jnp.int32)
    ilx = lx.astype(jnp.int32)

    # hoisted pixel iota (int32) shared by all 4 corners
    iota_p = jax.lax.broadcasted_iota(jnp.int32, (P, n), 0)

    acc = jnp.zeros((2, n), jnp.float32)
    for idx, wgt in _bilinear_corners(ity, ilx, dy, dx, H, W):
        onehot = jnp.where(iota_p == idx, 1.0, 0.0).astype(jnp.bfloat16)        # [P, Nt]
        g = jnp.dot(flow2, onehot, preferred_element_type=jnp.float32)          # [2, Nt]
        acc = acc + g * wgt
    out_ref[0] = acc


def _iwe_focus_kernel(evy_ref, evx_ref, pp_ref, pn_ref, nts_ref, out_ref,
                      acc_ref, sq_ref, nz_ref, *, H, W, P_TILE, LOSS_SCALING):
    """Fused bilinear scatter of warped events (4 IWE channels) + timestamp normalization
    + focus loss.  Grid = (B, pixel tiles, event tiles); event tiles are the innermost
    reduction, pixel tiles reduce into per-batch scalars, output is [B, 1, 1] per-batch loss.
    """
    pt = pl.program_id(1)
    et = pl.program_id(2)
    n_pt = pl.num_programs(1)
    n_et = pl.num_programs(2)

    @pl.when((pt == 0) & (et == 0))
    def _():
        out_ref[...] = jnp.zeros_like(out_ref)
        sq_ref[...] = jnp.zeros_like(sq_ref)
        nz_ref[...] = jnp.zeros_like(nz_ref)

    @pl.when(et == 0)
    def _():
        acc_ref[...] = jnp.zeros_like(acc_ref)

    y = evy_ref[0]                                       # [1, E]
    x = evx_ref[0]
    pp = pp_ref[0]
    pn = pn_ref[0]
    nts = nts_ref[0]
    e = y.shape[-1]

    ty = jnp.floor(y)
    lx = jnp.floor(x)
    dy = y - ty
    dx = x - lx
    ity = ty.astype(jnp.int32)
    ilx = lx.astype(jnp.int32)

    # hoisted pixel iota for this pixel tile (global pixel row index, int32)
    iota_p = jax.lax.broadcasted_iota(jnp.int32, (P_TILE, e), 0) + pt * P_TILE

    acc = acc_ref[...]
    for idx, wgt in _bilinear_corners(ity, ilx, dy, dx, H, W):
        onehot = jnp.where(iota_p == idx, 1.0, 0.0).astype(jnp.bfloat16)        # [P_TILE, E]
        wpp = wgt * pp
        wpn = wgt * pn
        a = jnp.concatenate([wpp, wpn, wpp * nts, wpn * nts], axis=0)           # [4, E]
        acc = acc + jax.lax.dot_general(
            a.astype(jnp.bfloat16), onehot, (((1,), (1,)), ((), ())),
            preferred_element_type=jnp.float32)                                 # [4, P_TILE]
    acc_ref[...] = acc

    # focus-loss epilogue for this pixel tile once all events have been scattered
    @pl.when(et == n_et - 1)
    def _():
        a4 = acc_ref[...]
        cnt_p = a4[0:1, :]
        cnt_n = a4[1:2, :]
        ts_p = a4[2:3, :] / (cnt_p + 1e-9)
        ts_n = a4[3:4, :] / (cnt_n + 1e-9)
        sq = (jnp.sum(ts_p * ts_p, axis=1, keepdims=True) +
              jnp.sum(ts_n * ts_n, axis=1, keepdims=True))                      # [1, 1]
        nz = jnp.sum(((cnt_p + cnt_n) != 0.0).astype(jnp.float32),
                     axis=1, keepdims=True)                                     # [1, 1]
        sq_ref[...] = sq_ref[...] + sq
        nz_ref[...] = nz_ref[...] + nz

    @pl.when((pt == n_pt - 1) & (et == n_et - 1))
    def _():
        if LOSS_SCALING:
            out_ref[0] = sq_ref[...] / (nz_ref[...] + 1e-9)
        else:
            out_ref[0] = sq_ref[...]


def _temporal_kernel(fq_ref, fn_ref, out_ref, num_ref, den_ref, *, H, W, Q_TILE):
    """One temporal-smoothness step: dense bilinear warp of flow_{j+1} at (pixel + flow_j)
    fused with the masked Charbonnier mean.  Grid = (B, j, query-pixel tiles)."""
    j = pl.program_id(1)
    qt = pl.program_id(2)
    n_qt = pl.num_programs(2)

    @pl.when((j == 0) & (qt == 0))
    def _():
        out_ref[...] = jnp.zeros_like(out_ref)

    @pl.when(qt == 0)
    def _():
        num_ref[...] = jnp.zeros_like(num_ref)
        den_ref[...] = jnp.zeros_like(den_ref)

    P = H * W
    fq = fq_ref[0, 0]                                    # [2, Q]  row0 = y-flow_j, row1 = x-flow_j
    fnext = fn_ref[0, 0].astype(jnp.bfloat16)            # [2, P]  flow_{j+1}
    q = Q_TILE

    pix = (jax.lax.broadcasted_iota(jnp.int32, (1, q), 1) + qt * Q_TILE).astype(jnp.float32)
    ybase = jnp.floor(pix / W)
    xbase = pix - ybase * W
    wy = ybase + fq[0:1, :]
    wx = xbase + fq[1:2, :]
    mask = ((wy >= 0.0) & (wy <= H - 1.0) & (wx >= 0.0) & (wx <= W - 1.0)).astype(jnp.float32)

    ty = jnp.floor(wy)
    lx = jnp.floor(wx)
    dy = wy - ty
    dx = wx - lx
    ity = ty.astype(jnp.int32)
    ilx = lx.astype(jnp.int32)

    iota_p = jax.lax.broadcasted_iota(jnp.int32, (P, q), 0)

    acc = jnp.zeros((2, q), jnp.float32)
    for idx, wgt in _bilinear_corners(ity, ilx, dy, dx, H, W):
        onehot = jnp.where(iota_p == idx, 1.0, 0.0).astype(jnp.bfloat16)        # [P, Q]
        g = jnp.dot(fnext, onehot, preferred_element_type=jnp.float32)          # [2, Q]
        acc = acc + g * wgt

    flow_dt = (jnp.sqrt((fq[0:1, :] - acc[0:1, :]) ** 2 + 1e-9) +
               jnp.sqrt((fq[1:2, :] - acc[1:2, :]) ** 2 + 1e-9))
    num_ref[...] = num_ref[...] + jnp.sum(flow_dt * mask, axis=1, keepdims=True)
    den_ref[...] = den_ref[...] + jnp.sum(mask, axis=1, keepdims=True)

    @pl.when(qt == n_qt - 1)
    def _():
        out_ref[0] = out_ref[0] + num_ref[...] / (den_ref[...] + 1e-9)


def _spatial_kernel(fx_ref, fy_ref, out_ref, *, T):
    """Spatial Charbonnier smoothness for one (batch, pass) tile, accumulated over passes."""
    t = pl.program_id(1)

    @pl.when(t == 0)
    def _():
        out_ref[...] = jnp.zeros_like(out_ref)

    fx = fx_ref[0, 0]                                    # [H, W]
    fy = fy_ref[0, 0]

    def charb(a, b):
        d = a - b
        return jnp.sqrt(d * d + 1e-6)

    def mean2(v):                                        # -> [1, 1]
        return jnp.mean(jnp.mean(v, axis=1, keepdims=True), axis=0, keepdims=True)

    d_dx = charb(fx[:, :-1], fx[:, 1:]) + charb(fy[:, :-1], fy[:, 1:])
    d_dy = charb(fx[:-1, :], fx[1:, :]) + charb(fy[:-1, :], fy[1:, :])
    d_dr = charb(fx[:-1, :-1], fx[1:, 1:]) + charb(fy[:-1, :-1], fy[1:, 1:])
    d_ur = charb(fx[1:, :-1], fx[:-1, 1:]) + charb(fy[1:, :-1], fy[:-1, 1:])

    term = (mean2(d_dx) + mean2(d_dy) + mean2(d_dr) + mean2(d_ur)) / 4.0
    out_ref[0] = out_ref[0] + term / float(T)


# --------------------------------------------------------------------------------------
# pallas_call wrappers
# --------------------------------------------------------------------------------------
@partial(jax.jit, static_argnames=("h", "w"))
def sample_flow(flow_x, flow_y, ev_y, ev_x, h, w):
    """get_event_flow: bilinear sample (flow_x, flow_y) [B,H,W] at events (y, x) [B,N].
    Returns [B, 2, N] with row 0 = y-flow, row 1 = x-flow (lane-dense event axis)."""
    B = flow_x.shape[0]
    P = h * w
    N = ev_y.shape[1]
    flow2 = jnp.concatenate([flow_y.reshape(B, 1, P), flow_x.reshape(B, 1, P)], axis=1)
    n_tile = _pick_tile(N, (512, 256, 128))
    return pl.pallas_call(
        partial(_sample_flow_kernel, H=h, W=w),
        out_shape=jax.ShapeDtypeStruct((B, 2, N), jnp.float32),
        grid=(B, N // n_tile),
        in_specs=[pl.BlockSpec((1, 2, P), lambda b, nt: (b, 0, 0)),
                  pl.BlockSpec((1, 1, n_tile), lambda b, nt: (b, 0, nt)),
                  pl.BlockSpec((1, 1, n_tile), lambda b, nt: (b, 0, nt))],
        out_specs=pl.BlockSpec((1, 2, n_tile), lambda b, nt: (b, 0, nt)),
        compiler_params=pltpu.CompilerParams(
            dimension_semantics=("parallel", "parallel"),
            vmem_limit_bytes=VMEM_LIMIT),
    )(flow2, ev_y.reshape(B, 1, N), ev_x.reshape(B, 1, N))


@partial(jax.jit, static_argnames=("h", "w", "loss_scaling"))
def iwe_focus_loss(ev_y, ev_x, pp, pn, nts, h, w, loss_scaling):
    """Fused IWE scatter + timestamp normalization + focus loss; returns scalar (sum over B)."""
    B, M = ev_y.shape
    P = h * w
    p_tile = _pick_tile(P, (1024, 512, 256, 128))
    e_tile = _pick_tile(M, (512, 256, 128))
    out = pl.pallas_call(
        partial(_iwe_focus_kernel, H=h, W=w, P_TILE=p_tile, LOSS_SCALING=loss_scaling),
        out_shape=jax.ShapeDtypeStruct((B, 1, 1), jnp.float32),
        grid=(B, P // p_tile, M // e_tile),
        in_specs=[pl.BlockSpec((1, 1, e_tile), lambda b, pt, et: (b, 0, et))] * 5,
        out_specs=pl.BlockSpec((1, 1, 1), lambda b, pt, et: (b, 0, 0)),
        scratch_shapes=[pltpu.VMEM((4, p_tile), jnp.float32),
                        pltpu.VMEM((1, 1), jnp.float32),
                        pltpu.VMEM((1, 1), jnp.float32)],
        compiler_params=pltpu.CompilerParams(
            dimension_semantics=("parallel", "arbitrary", "arbitrary"),
            vmem_limit_bytes=VMEM_LIMIT),
    )(ev_y.reshape(B, 1, M), ev_x.reshape(B, 1, M), pp.reshape(B, 1, M),
      pn.reshape(B, 1, M), nts.reshape(B, 1, M))
    return jnp.sum(out)


@partial(jax.jit, static_argnames=("h", "w"))
def temporal_smooth(flow4, h, w):
    """Sum over (b, j) of masked Charbonnier mean between flow_j and warped flow_{j+1}.
    flow4: [B, T, 2, P] with channel 0 = y-flow, 1 = x-flow."""
    B, T, _, P = flow4.shape
    q_tile = _pick_tile(P, (512, 256, 128))
    out = pl.pallas_call(
        partial(_temporal_kernel, H=h, W=w, Q_TILE=q_tile),
        out_shape=jax.ShapeDtypeStruct((B, 1, 1), jnp.float32),
        grid=(B, T - 1, P // q_tile),
        in_specs=[pl.BlockSpec((1, 1, 2, q_tile), lambda b, j, qt: (b, j, 0, qt)),
                  pl.BlockSpec((1, 1, 2, P), lambda b, j, qt: (b, j + 1, 0, 0))],
        out_specs=pl.BlockSpec((1, 1, 1), lambda b, j, qt: (b, 0, 0)),
        scratch_shapes=[pltpu.VMEM((1, 1), jnp.float32),
                        pltpu.VMEM((1, 1), jnp.float32)],
        compiler_params=pltpu.CompilerParams(
            dimension_semantics=("parallel", "arbitrary", "arbitrary"),
            vmem_limit_bytes=VMEM_LIMIT),
    )(flow4, flow4)
    return jnp.sum(out)


@jax.jit
def spatial_smooth(flow_x_maps, flow_y_maps):
    """Sum over b of (mean_dx + mean_dy + mean_dr + mean_ur)/4 averaged over passes."""
    B, T, H, W = flow_x_maps.shape
    out = pl.pallas_call(
        partial(_spatial_kernel, T=T),
        out_shape=jax.ShapeDtypeStruct((B, 1, 1), jnp.float32),
        grid=(B, T),
        in_specs=[pl.BlockSpec((1, 1, H, W), lambda b, t: (b, t, 0, 0)),
                  pl.BlockSpec((1, 1, H, W), lambda b, t: (b, t, 0, 0))],
        out_specs=pl.BlockSpec((1, 1, 1), lambda b, t: (b, 0, 0)),
        compiler_params=pltpu.CompilerParams(
            dimension_semantics=("parallel", "arbitrary")),
    )(flow_x_maps, flow_y_maps)
    return jnp.sum(out)


# --------------------------------------------------------------------------------------
# JAX glue reproducing the module's forward-pass bookkeeping
# --------------------------------------------------------------------------------------
class IterativeCM:
    """JAX/Pallas re-implementation of loss/flow.py::Iterative (forward only)."""

    def __init__(self, config, loss_scaling=True, border_compensation=True):
        if config["loss"]["iterative_mode"] == "four":
            config["data"]["passes_loss"] *= 2
        self.config = config
        self.loss_scaling = loss_scaling
        self.border_compensation = border_compensation
        self.res = config["loader"]["resolution"]
        self.batch_size = config["loader"]["batch_size"]
        self.flow_spat_smooth_weight = config["loss"]["flow_spat_smooth_weight"]
        self.flow_temp_smooth_weight = config["loss"]["flow_temp_smooth_weight"]
        self._passes = 0
        self._num_flows = None
        self._flow_maps_x = None
        self._flow_maps_y = None
        self.passes_loss = [config["data"]["passes_loss"] // 2 ** s
                            for s in range(config["data"]["scales_loss"])]
        div = {"one": 1, "two": 2, "four": 4}[config["loss"]["iterative_mode"]]
        self.delta_passes = [p // div for p in self.passes_loss]
        # structure-of-arrays, lane-dense event buffers (graph + detached branches)
        self._ev_ts, self._ev_y, self._ev_x, self._ev_pp, self._ev_pn = [], [], [], [], []
        self._d_ev_ts, self._d_ev_y, self._d_ev_x, self._d_ev_pp, self._d_ev_pn = [], [], [], [], []

    # ------------------------------------------------------------------ state updates
    def update_base(self, flow_list):
        if self._num_flows is None:
            self._num_flows = len(flow_list)
        if self._flow_maps_x is None:
            self._flow_maps_x, self._flow_maps_y = [], []
        for i, flow in enumerate(flow_list):
            if i == len(self._flow_maps_x):
                self._flow_maps_x.append(flow[:, 0:1])
                self._flow_maps_y.append(flow[:, 1:2])
            else:
                self._flow_maps_x[i] = jnp.concatenate([self._flow_maps_x[i], flow[:, 0:1]], axis=1)
                self._flow_maps_y[i] = jnp.concatenate([self._flow_maps_y[i], flow[:, 1:2]], axis=1)

    def update(self, flow_list, event_list, pol_mask, d_event_list, d_pol_mask):
        self.update_base(flow_list)

        def split(ev, pm):
            ts = ev[:, :, 0] + float(self._passes)
            y = ev[:, :, 1]
            x = ev[:, :, 2]
            pp = pm[:, :, 0]
            pn = pm[:, :, 1]
            if self.config["loss"]["round_ts"]:
                ts = jnp.full_like(ts, ts.min() + 0.5)
            n = ts.shape[1]
            n_pad = max(LANE, ((n + LANE - 1) // LANE) * LANE)
            # padded events carry zero polarity masks -> no contribution anywhere
            return (_pad_lane(ts, n_pad), _pad_lane(y, n_pad), _pad_lane(x, n_pad),
                    _pad_lane(pp, n_pad), _pad_lane(pn, n_pad))

        ts, y, x, pp, pn = split(event_list, pol_mask)
        d_ts, d_y, d_x, d_pp, d_pn = split(jax.lax.stop_gradient(d_event_list),
                                           jax.lax.stop_gradient(d_pol_mask))
        self._ev_ts.append(ts); self._ev_y.append(y); self._ev_x.append(x)
        self._ev_pp.append(pp); self._ev_pn.append(pn)
        self._d_ev_ts.append(d_ts); self._d_ev_y.append(d_y); self._d_ev_x.append(d_x)
        self._d_ev_pp.append(d_pp); self._d_ev_pn.append(d_pn)
        self._passes += 1

    # ------------------------------------------------------------------ warping schedule
    def update_warping_indices(self, tref, t, cnt, mode="forward"):
        warping_ts = t + cnt
        sampling_idx = t + cnt
        if mode == "forward":
            warping_ts += 1
            break_flag = t + cnt < tref
            cnt += 1
        elif mode == "backward":
            break_flag = t + cnt >= tref
            cnt -= 1
        else:
            raise ValueError("Unknown warping mode: {}".format(mode))
        return cnt, break_flag, sampling_idx, warping_ts

    def event_warping(self, tref, t, i, mode, buf_y, buf_x, buf_ts, buf_pp, buf_pn, store):
        w_y, w_x, w_ts, w_pp, w_pn = store
        H, W = self.res
        cnt = 0
        ev_y = buf_y[t]
        ev_x = buf_x[t]
        warp_ts = buf_ts[t]
        pp = buf_pp[t]
        pn = buf_pn[t]
        while True:
            cnt, break_flag, sampling_idx, warping_ts = self.update_warping_indices(
                tref, t, cnt, mode=mode)
            if not break_flag:
                break
            flow = sample_flow(self._flow_maps_x[i][:, sampling_idx],
                               self._flow_maps_y[i][:, sampling_idx],
                               ev_y, ev_x, H, W)                       # [B, 2, N] (y, x)
            dt = float(warping_ts) - warp_ts
            ev_y = ev_y + dt * flow[:, 0]
            ev_x = ev_x + dt * flow[:, 1]
            warp_ts = jnp.full_like(warp_ts, float(warping_ts))
            # purge_unfeasible: zero OOB locations AND the polarity masks in lockstep.
            mask = ((ev_y >= 0.0) & (ev_y <= H - 1.0) &
                    (ev_x >= 0.0) & (ev_x <= W - 1.0)).astype(ev_y.dtype)
            ev_y = ev_y * mask
            ev_x = ev_x * mask
            pp = pp * mask
            pn = pn * mask
            w_y[warping_ts][t] = ev_y
            w_x[warping_ts][t] = ev_x
            w_ts[warping_ts][t] = buf_ts[t]
            w_pp[warping_ts][t] = pp
            w_pn[warping_ts][t] = pn
        return store

    def _warp_all(self, i, max_passes, buf_y, buf_x, buf_ts, buf_pp, buf_pn):
        mk = lambda: [[None] * max_passes for _ in range(max_passes + 1)]
        store = (mk(), mk(), mk(), mk(), mk())
        for t in range(max_passes):
            self.event_warping(max_passes, t, i, "forward", buf_y, buf_x, buf_ts, buf_pp, buf_pn, store)
            self.event_warping(0, t, i, "backward", buf_y, buf_x, buf_ts, buf_pp, buf_pn, store)
        return store

    # ------------------------------------------------------------------ loss pieces
    def flow_spatial_smoothing(self):
        loss = jnp.zeros((), jnp.float32)
        for i in range(self._num_flows):
            loss = loss + spatial_smooth(self._flow_maps_x[i], self._flow_maps_y[i])
        loss = loss / self._num_flows
        return self.flow_spat_smooth_weight * loss

    def flow_temporal_smoothing(self):
        H, W = self.res
        P = H * W
        B = self.batch_size
        loss = jnp.zeros((), jnp.float32)
        for i in range(self._num_flows):
            T = self._flow_maps_x[i].shape[1]
            fy = self._flow_maps_y[i].reshape(B, T, 1, P)
            fx = self._flow_maps_x[i].reshape(B, T, 1, P)
            flow4 = jnp.concatenate([fy, fx], axis=2)                  # [B, T, 2, P]
            loss = loss + temporal_smooth(flow4, H, W)
        loss = loss / self._num_flows
        loss = loss / (self._passes - 1)
        return self.flow_temp_smooth_weight * loss

    # ------------------------------------------------------------------ forward
    def forward(self):
        loss = jnp.zeros((), jnp.float32)
        max_passes = max(self.passes_loss)
        H, W = self.res
        for i in range(self._num_flows):
            ev_y, ev_x, ev_ts, ev_pp, ev_pn = self._warp_all(
                i, max_passes, self._ev_y, self._ev_x, self._ev_ts, self._ev_pp, self._ev_pn)
            # detached branch (torch.no_grad): forward-only -> same numerics.
            dv_y, dv_x, dv_ts, dv_pp, dv_pn = self._warp_all(
                i, max_passes, self._d_ev_y, self._d_ev_x, self._d_ev_ts, self._d_ev_pp, self._d_ev_pn)

            for s, scale in enumerate(self.passes_loss):
                loss_update = jnp.zeros((), jnp.float32)
                for w in range(2 ** s):
                    low_pass = w * scale
                    high_pass = (w + 1) * scale
                    low_tref = low_pass
                    high_tref = high_pass + 1
                    if self.config["loss"]["iterative_mode"] == "four":
                        low_tref = low_pass + self.delta_passes[s]
                        high_tref = low_pass + 3 * self.delta_passes[s] + 1

                    shared_pp = [None] * max_passes
                    shared_pn = [None] * max_passes
                    d_shared_pp = [None] * max_passes
                    d_shared_pn = [None] * max_passes
                    if self.border_compensation:
                        for t in range(low_tref, high_tref - 1):
                            tpp, tpn = ev_pp[low_tref][t], ev_pn[low_tref][t]
                            dpp, dpn = dv_pp[low_tref][t], dv_pn[low_tref][t]
                            for tref in range(low_tref + 1, high_tref):
                                tpp = tpp * ev_pp[tref][t]
                                tpn = tpn * ev_pn[tref][t]
                                dpp = dpp * dv_pp[tref][t]
                                dpn = dpn * dv_pn[tref][t]
                            shared_pp[t], shared_pn[t] = tpp, tpn
                            d_shared_pp[t], d_shared_pn[t] = dpp, dpn

                    for tref in range(low_tref, high_tref):
                        lo = max(low_pass, tref - self.delta_passes[s])
                        hi = min(high_pass, tref + self.delta_passes[s])

                        def gather(ys, xs, tss, pps, pns, sp, sn):
                            yy = jnp.concatenate(ys[tref][lo:hi], axis=1)
                            xx = jnp.concatenate(xs[tref][lo:hi], axis=1)
                            tt = jnp.concatenate(tss[tref][lo:hi], axis=1)
                            if self.border_compensation:
                                cpp = jnp.concatenate(sp[lo:hi], axis=1)
                                cpn = jnp.concatenate(sn[lo:hi], axis=1)
                            else:
                                cpp = jnp.concatenate(pps[tref][lo:hi], axis=1)
                                cpn = jnp.concatenate(pns[tref][lo:hi], axis=1)
                            nts = 1.0 - jnp.abs(float(tref) - tt) / float(self.delta_passes[s])
                            return yy, xx, cpp, cpn, nts

                        gy, gx, gpp, gpn, gnts = gather(ev_y, ev_x, ev_ts, ev_pp, ev_pn,
                                                        shared_pp, shared_pn)
                        hy, hx, hpp, hpn, hnts = gather(dv_y, dv_x, dv_ts, dv_pp, dv_pn,
                                                        d_shared_pp, d_shared_pn)
                        # iwe + d_iwe == scatter of the union of both event sets, so the add,
                        # the timestamp normalization and the focus loss fuse in one kernel.
                        all_y = jnp.concatenate([gy, hy], axis=1)
                        all_x = jnp.concatenate([gx, hx], axis=1)
                        all_pp = jnp.concatenate([gpp, hpp], axis=1)
                        all_pn = jnp.concatenate([gpn, hpn], axis=1)
                        all_nts = jnp.concatenate([gnts, hnts], axis=1)
                        loss_update = loss_update + iwe_focus_loss(
                            all_y, all_x, all_pp, all_pn, all_nts, H, W, self.loss_scaling)

                loss_update = loss_update / (2 ** s)
                loss_update = loss_update / (2 * self.delta_passes[s] + 1)
                loss = loss + loss_update

        loss = loss / self.config["data"]["scales_loss"]
        loss = loss / self._num_flows
        if self.flow_spat_smooth_weight is not None:
            loss = loss + self.flow_spatial_smoothing()
        if self.flow_temp_smooth_weight is not None and self._passes > 1:
            loss = loss + self.flow_temporal_smoothing()
        return loss


# --------------------------------------------------------------------------------------
if __name__ == "__main__":
    H, W = 16, 16
    B = 2
    N_EVENTS = 8
    config = {
        "loader": {"resolution": [H, W], "batch_size": B},
        "loss": {"flow_spat_smooth_weight": 1e-3, "flow_temp_smooth_weight": 1e-3,
                 "iterative_mode": "one", "round_ts": False},
        "data": {"scales_loss": 1, "passes_loss": 2},
    }
    loss_fn = IterativeCM(config, loss_scaling=True, border_compensation=True)

    key = jax.random.PRNGKey(0)
    for p in range(config["data"]["passes_loss"]):
        key, kf, kt, ky, kx, kp = jax.random.split(key, 6)
        flow = jax.random.uniform(kf, (B, 2, H, W), jnp.float32, minval=-2.0, maxval=2.0)
        ts = jax.random.uniform(kt, (B, N_EVENTS, 1), jnp.float32, minval=0.0, maxval=1.0)
        ev_y = jax.random.uniform(ky, (B, N_EVENTS, 1), jnp.float32, minval=0.0, maxval=H - 1.0)
        ev_x = jax.random.uniform(kx, (B, N_EVENTS, 1), jnp.float32, minval=0.0, maxval=W - 1.0)
        pol = jnp.where(jax.random.uniform(kp, (B, N_EVENTS, 1)) > 0.5, 1.0, -1.0).astype(jnp.float32)
        event_list = jnp.concatenate([ts, ev_y, ev_x, pol], axis=-1)               # (ts, y, x, p)
        pol_mask = jnp.concatenate([(pol > 0).astype(jnp.float32),
                                    (pol < 0).astype(jnp.float32)], axis=-1)       # (pos, neg)
        # detached copies (forward-only: same values)
        loss_fn.update([flow], event_list, pol_mask, jnp.array(event_list), jnp.array(pol_mask))

    # TODO(synk): backward/grad path (torch.no_grad detached branch only matters for autodiff).
    loss = loss_fn.forward()
    loss = jax.block_until_ready(loss)
    assert jnp.isfinite(loss), "loss is not finite"
    print("KERNEL_OK")
</pallas_src>

<mosaic_0001>
module attributes {stable_mosaic.version = 11 : i64} {
  func.func @_sample_flow_kernel(%arg0: i32, %arg1: i32, %arg2: memref<1x2x256xf32, #tpu.memory_space<vmem>>, %arg3: memref<1x1x128xf32, #tpu.memory_space<vmem>>, %arg4: memref<1x1x128xf32, #tpu.memory_space<vmem>>, %arg5: memref<1x2x128xf32, #tpu.memory_space<vmem>>) attributes {dimension_semantics = [#tpu.dimension_semantics<parallel>, #tpu.dimension_semantics<parallel>], iteration_bounds = array<i64: 2, 1>, scalar_prefetch = 0 : i64, scratch_operands = 0 : i64, tpu.core_type = #tpu.core_type<tc>, window_params = [{transform_indices = @transform_0, window_bounds = array<i64: 1, 2, 256>}, {transform_indices = @transform_1, window_bounds = array<i64: 1, 1, 128>}, {transform_indices = @transform_2, window_bounds = array<i64: 1, 1, 128>}, {transform_indices = @transform_3, window_bounds = array<i64: 1, 2, 128>}]} {
    %c0 = arith.constant 0 : index
    %c0_0 = arith.constant 0 : index
    %c0_1 = arith.constant 0 : index
    %0 = vector.load %arg2[%c0, %c0_0, %c0_1] : memref<1x2x256xf32, #tpu.memory_space<vmem>>, vector<1x2x256xf32>
    %1 = vector.shape_cast %0 : vector<1x2x256xf32> to vector<2x256xf32>
    %2 = arith.truncf %1 : vector<2x256xf32> to vector<2x256xbf16>
    %c0_2 = arith.constant 0 : index
    %c0_3 = arith.constant 0 : index
    %c0_4 = arith.constant 0 : index
    %3 = vector.load %arg3[%c0_2, %c0_3, %c0_4] : memref<1x1x128xf32, #tpu.memory_space<vmem>>, vector<1x1x128xf32>
    %4 = vector.shape_cast %3 : vector<1x1x128xf32> to vector<1x128xf32>
    %c0_5 = arith.constant 0 : index
    %c0_6 = arith.constant 0 : index
    %c0_7 = arith.constant 0 : index
    %5 = vector.load %arg4[%c0_5, %c0_6, %c0_7] : memref<1x1x128xf32, #tpu.memory_space<vmem>>, vector<1x1x128xf32>
    %6 = vector.shape_cast %5 : vector<1x1x128xf32> to vector<1x128xf32>
    %7 = math.floor %4 : vector<1x128xf32>
    %8 = math.floor %6 : vector<1x128xf32>
    %9 = arith.subf %4, %7 : vector<1x128xf32>
    %10 = arith.subf %6, %8 : vector<1x128xf32>
    %11 = arith.fptosi %7 : vector<1x128xf32> to vector<1x128xi32>
    %12 = arith.fptosi %8 : vector<1x128xf32> to vector<1x128xi32>
    %13 = tpu.iota {dimensions = array<i32: 0>} : vector<256x128xi32>
    %cst = arith.constant 0.000000e+00 : f32
    %14 = vector.broadcast %cst : f32 to vector<2x128xf32>
    %cst_8 = arith.constant 1.000000e+00 : f32
    %15 = vector.broadcast %cst_8 : f32 to vector<1x128xf32>
    %16 = arith.subf %15, %9 : vector<1x128xf32>
    %cst_9 = arith.constant 1.000000e+00 : f32
    %17 = vector.broadcast %cst_9 : f32 to vector<1x128xf32>
    %18 = arith.subf %17, %10 : vector<1x128xf32>
    %c0_i32 = arith.constant 0 : i32
    %19 = vector.broadcast %c0_i32 : i32 to vector<1x128xi32>
    %20 = arith.addi %11, %19 : vector<1x128xi32>
    %c0_i32_10 = arith.constant 0 : i32
    %21 = vector.broadcast %c0_i32_10 : i32 to vector<1x128xi32>
    %22 = arith.addi %12, %21 : vector<1x128xi32>
    %c0_i32_11 = arith.constant 0 : i32
    %23 = vector.broadcast %c0_i32_11 : i32 to vector<1x128xi32>
    %24 = arith.cmpi sge, %20, %23 : vector<1x128xi32>
    %c15_i32 = arith.constant 15 : i32
    %25 = vector.broadcast %c15_i32 : i32 to vector<1x128xi32>
    %26 = arith.cmpi sle, %20, %25 : vector<1x128xi32>
    %27 = arith.andi %24, %26 : vector<1x128xi1>
    %c0_i32_12 = arith.constant 0 : i32
    %28 = vector.broadcast %c0_i32_12 : i32 to vector<1x128xi32>
    %29 = arith.cmpi sge, %22, %28 : vector<1x128xi32>
    %30 = arith.andi %27, %29 : vector<1x128xi1>
    %c15_i32_13 = arith.constant 15 : i32
    %31 = vector.broadcast %c15_i32_13 : i32 to vector<1x128xi32>
    %32 = arith.cmpi sle, %22, %31 : vector<1x128xi32>
    %33 = arith.andi %30, %32 : vector<1x128xi1>
    %34 = arith.extui %33 : vector<1x128xi1> to vector<1x128xi32>
    %35 = arith.sitofp %34 : vector<1x128xi32> to vector<1x128xf32>
    %c16_i32 = arith.constant 16 : i32
    %36 = vector.broadcast %c16_i32 : i32 to vector<1x128xi32>
    %37 = arith.muli %20, %36 : vector<1x128xi32>
    %38 = arith.addi %37, %22 : vector<1x128xi32>
    %39 = arith.mulf %16, %18 : vector<1x128xf32>
    %40 = arith.mulf %39, %35 : vector<1x128xf32>
    %c0_i32_14 = arith.constant 0 : i32
    %41 = vector.broadcast %c0_i32_14 : i32 to vector<1x128xi32>
    %42 = arith.addi %11, %41 : vector<1x128xi32>
    %c1_i32 = arith.constant 1 : i32
    %43 = vector.broadcast %c1_i32 : i32 to vector<1x128xi32>
    %44 = arith.addi %12, %43 : vector<1x128xi32>
    %c0_i32_15 = arith.constant 0 : i32
    %45 = vector.broadcast %c0_i32_15 : i32 to vector<1x128xi32>
    %46 = arith.cmpi sge, %42, %45 : vector<1x128xi32>
    %c15_i32_16 = arith.constant 15 : i32
    %47 = vector.broadcast %c15_i32_16 : i32 to vector<1x128xi32>
    %48 = arith.cmpi sle, %42, %47 : vector<1x128xi32>
    %49 = arith.andi %46, %48 : vector<1x128xi1>
    %c0_i32_17 = arith.constant 0 : i32
    %50 = vector.broadcast %c0_i32_17 : i32 to vector<1x128xi32>
    %51 = arith.cmpi sge, %44, %50 : vector<1x128xi32>
    %52 = arith.andi %49, %51 : vector<1x128xi1>
    %c15_i32_18 = arith.constant 15 : i32
    %53 = vector.broadcast %c15_i32_18 : i32 to vector<1x128xi32>
    %54 = arith.cmpi sle, %44, %53 : vector<1x128xi32>
    %55 = arith.andi %52, %54 : vector<1x128xi1>
    %56 = arith.extui %55 : vector<1x128xi1> to vector<1x128xi32>
    %57 = arith.sitofp %56 : vector<1x128xi32> to vector<1x128xf32>
    %c16_i32_19 = arith.constant 16 : i32
    %58 = vector.broadcast %c16_i32_19 : i32 to vector<1x128xi32>
    %59 = arith.muli %42, %58 : vector<1x128xi32>
    %60 = arith.addi %59, %44 : vector<1x128xi32>
    %61 = arith.mulf %16, %10 : vector<1x128xf32>
    %62 = arith.mulf %61, %57 : vector<1x128xf32>
    %cst_20 = arith.constant 1.000000e+00 : f32
    %63 = vector.broadcast %cst_20 : f32 to vector<1x128xf32>
    %64 = arith.subf %63, %10 : vector<1x128xf32>
    %c1_i32_21 = arith.constant 1 : i32
    %65 = vector.broadcast %c1_i32_21 : i32 to vector<1x128xi32>
    %66 = arith.addi %11, %65 : vector<1x128xi32>
    %c0_i32_22 = arith.constant 0 : i32
    %67 = vector.broadcast %c0_i32_22 : i32 to vector<1x128xi32>
    %68 = arith.addi %12, %67 : vector<1x128xi32>
    %c0_i32_23 = arith.constant 0 : i32
    %69 = vector.broadcast %c0_i32_23 : i32 to vector<1x128xi32>
    %70 = arith.cmpi sge, %66, %69 : vector<1x128xi32>
    %c15_i32_24 = arith.constant 15 : i32
    %71 = vector.broadcast %c15_i32_24 : i32 to vector<1x128xi32>
    %72 = arith.cmpi sle, %66, %71 : vector<1x128xi32>
    %73 = arith.andi %70, %72 : vector<1x128xi1>
    %c0_i32_25 = arith.constant 0 : i32
    %74 = vector.broadcast %c0_i32_25 : i32 to vector<1x128xi32>
    %75 = arith.cmpi sge, %68, %74 : vector<1x128xi32>
    %76 = arith.andi %73, %75 : vector<1x128xi1>
    %c15_i32_26 = arith.constant 15 : i32
    %77 = vector.broadcast %c15_i32_26 : i32 to vector<1x128xi32>
    %78 = arith.cmpi sle, %68, %77 : vector<1x128xi32>
    %79 = arith.andi %76, %78 : vector<1x128xi1>
    %80 = arith.extui %79 : vector<1x128xi1> to vector<1x128xi32>
    %81 = arith.sitofp %80 : vector<1x128xi32> to vector<1x128xf32>
    %c16_i32_27 = arith.constant 16 : i32
    %82 = vector.broadcast %c16_i32_27 : i32 to vector<1x128xi32>
    %83 = arith.muli %66, %82 : vector<1x128xi32>
    %84 = arith.addi %83, %68 : vector<1x128xi32>
    %85 = arith.mulf %9, %64 : vector<1x128xf32>
    %86 = arith.mulf %85, %81 : vector<1x128xf32>
    %c1_i32_28 = arith.constant 1 : i32
    %87 = vector.broadcast %c1_i32_28 : i32 to vector<1x128xi32>
    %88 = arith.addi %11, %87 : vector<1x128xi32>
    %c1_i32_29 = arith.constant 1 : i32
    %89 = vector.broadcast %c1_i32_29 : i32 to vector<1x128xi32>
    %90 = arith.addi %12, %89 : vector<1x128xi32>
    %c0_i32_30 = arith.constant 0 : i32
    %91 = vector.broadcast %c0_i32_30 : i32 to vector<1x128xi32>
    %92 = arith.cmpi sge, %88, %91 : vector<1x128xi32>
    %c15_i32_31 = arith.constant 15 : i32
    %93 = vector.broadcast %c15_i32_31 : i32 to vector<1x128xi32>
    %94 = arith.cmpi sle, %88, %93 : vector<1x128xi32>
    %95 = arith.andi %92, %94 : vector<1x128xi1>
    %c0_i32_32 = arith.constant 0 : i32
    %96 = vector.broadcast %c0_i32_32 : i32 to vector<1x128xi32>
    %97 = arith.cmpi sge, %90, %96 : vector<1x128xi32>
    %98 = arith.andi %95, %97 : vector<1x128xi1>
    %c15_i32_33 = arith.constant 15 : i32
    %99 = vector.broadcast %c15_i32_33 : i32 to vector<1x128xi32>
    %100 = arith.cmpi sle, %90, %99 : vector<1x128xi32>
    %101 = arith.andi %98, %100 : vector<1x128xi1>
    %102 = arith.extui %101 : vector<1x128xi1> to vector<1x128xi32>
    %103 = arith.sitofp %102 : vector<1x128xi32> to vector<1x128xf32>
    %c16_i32_34 = arith.constant 16 : i32
    %104 = vector.broadcast %c16_i32_34 : i32 to vector<1x128xi32>
    %105 = arith.muli %88, %104 : vector<1x128xi32>
    %106 = arith.addi %105, %90 : vector<1x128xi32>
    %107 = arith.mulf %9, %10 : vector<1x128xf32>
    %108 = arith.mulf %107, %103 : vector<1x128xf32>
    %109 = vector.broadcast %38 : vector<1x128xi32> to vector<256x128xi32>
    %110 = arith.cmpi eq, %13, %109 : vector<256x128xi32>
    %cst_35 = arith.constant 1.000000e+00 : f32
    %cst_36 = arith.constant 0.000000e+00 : f32
    %111 = vector.broadcast %cst_35 : f32 to vector<256x128xf32>
    %112 = vector.broadcast %cst_36 : f32 to vector<256x128xf32>
    %113 = arith.select %110, %111, %112 : vector<256x128xi1>, vector<256x128xf32>
    %114 = arith.truncf %113 : vector<256x128xf32> to vector<256x128xbf16>
    %cst_37 = arith.constant dense<0.000000e+00> : vector<2x128xf32>
    %115 = tpu.matmul %2, %114, %cst_37 {dimension_numbers = #tpu.dot_dimension_numbers<[1], [0], [0], [1], [0, 0, 1, 1], [], []>} : vector<2x256xbf16>, vector<256x128xbf16>, vector<2x128xf32> -> vector<2x128xf32>
    %116 = vector.broadcast %40 : vector<1x128xf32> to vector<2x128xf32>
    %117 = arith.mulf %115, %116 : vector<2x128xf32>
    %118 = arith.addf %14, %117 : vector<2x128xf32>
    %119 = vector.broadcast %60 : vector<1x128xi32> to vector<256x128xi32>
    %120 = arith.cmpi eq, %13, %119 : vector<256x128xi32>
    %cst_38 = arith.constant 1.000000e+00 : f32
    %cst_39 = arith.constant 0.000000e+00 : f32
    %121 = vector.broadcast %cst_38 : f32 to vector<256x128xf32>
    %122 = vector.broadcast %cst_39 : f32 to vector<256x128xf32>
    %123 = arith.select %120, %121, %122 : vector<256x128xi1>, vector<256x128xf32>
    %124 = arith.truncf %123 : vector<256x128xf32> to vector<256x128xbf16>
    %cst_40 = arith.constant dense<0.000000e+00> : vector<2x128xf32>
    %125 = tpu.matmul %2, %124, %cst_40 {dimension_numbers = #tpu.dot_dimension_numbers<[1], [0], [0], [1], [0, 0, 1, 1], [], []>} : vector<2x256xbf16>, vector<256x128xbf16>, vector<2x128xf32> -> vector<2x128xf32>
    %126 = vector.broadcast %62 : vector<1x128xf32> to vector<2x128xf32>
    %127 = arith.mulf %125, %126 : vector<2x128xf32>
    %128 = arith.addf %118, %127 : vector<2x128xf32>
    %129 = vector.broadcast %84 : vector<1x128xi32> to vector<256x128xi32>
    %130 = arith.cmpi eq, %13, %129 : vector<256x128xi32>
    %cst_41 = arith.constant 1.000000e+00 : f32
    %cst_42 = arith.constant 0.000000e+00 : f32
    %131 = vector.broadcast %cst_41 : f32 to vector<256x128xf32>
    %132 = vector.broadcast %cst_42 : f32 to vector<256x128xf32>
    %133 = arith.select %130, %131, %132 : vector<256x128xi1>, vector<256x128xf32>
    %134 = arith.truncf %133 : vector<256x128xf32> to vector<256x128xbf16>
    %cst_43 = arith.constant dense<0.000000e+00> : vector<2x128xf32>
    %135 = tpu.matmul %2, %134, %cst_43 {dimension_numbers = #tpu.dot_dimension_numbers<[1], [0], [0], [1], [0, 0, 1, 1], [], []>} : vector<2x256xbf16>, vector<256x128xbf16>, vector<2x128xf32> -> vector<2x128xf32>
    %136 = vector.broadcast %86 : vector<1x128xf32> to vector<2x128xf32>
    %137 = arith.mulf %135, %136 : vector<2x128xf32>
    %138 = arith.addf %128, %137 : vector<2x128xf32>
    %139 = vector.broadcast %106 : vector<1x128xi32> to vector<256x128xi32>
    %140 = arith.cmpi eq, %13, %139 : vector<256x128xi32>
    %cst_44 = arith.constant 1.000000e+00 : f32
    %cst_45 = arith.constant 0.000000e+00 : f32
    %141 = vector.broadcast %cst_44 : f32 to vector<256x128xf32>
    %142 = vector.broadcast %cst_45 : f32 to vector<256x128xf32>
    %143 = arith.select %140, %141, %142 : vector<256x128xi1>, vector<256x128xf32>
    %144 = arith.truncf %143 : vector<256x128xf32> to vector<256x128xbf16>
    %cst_46 = arith.constant dense<0.000000e+00> : vector<2x128xf32>
    %145 = tpu.matmul %2, %144, %cst_46 {dimension_numbers = #tpu.dot_dimension_numbers<[1], [0], [0], [1], [0, 0, 1, 1], [], []>} : vector<2x256xbf16>, vector<256x128xbf16>, vector<2x128xf32> -> vector<2x128xf32>
    %146 = vector.broadcast %108 : vector<1x128xf32> to vector<2x128xf32>
    %147 = arith.mulf %145, %146 : vector<2x128xf32>
    %148 = arith.addf %138, %147 : vector<2x128xf32>
    %c0_47 = arith.constant 0 : index
    %c0_48 = arith.constant 0 : index
    %c0_49 = arith.constant 0 : index
    %149 = vector.load %arg5[%c0_47, %c0_48, %c0_49] : memref<1x2x128xf32, #tpu.memory_space<vmem>>, vector<1x2x128xf32>
    %150 = vector.shape_cast %149 : vector<1x2x128xf32> to vector<2x128xf32>
    %151 = vector.shape_cast %148 : vector<2x128xf32> to vector<1x2x128xf32>
    tpu.vector_store %arg5[%c0_47, %c0_48, %c0_49], %151 {strides = array<i32>} : memref<1x2x128xf32, #tpu.memory_space<vmem>>, vector<1x2x128xf32>,
    return
  }
  func.func @transform_0(%arg0: i32, %arg1: i32) -> (i32, i32, i32) {
    %c0_i32 = arith.constant 0 : i32
    %c0_i32_0 = arith.constant 0 : i32
    %c0_i32_1 = arith.constant 0 : i32
    return %arg0, %c0_i32, %c0_i32_0 : i32, i32, i32
  }
  func.func @transform_1(%arg0: i32, %arg1: i32) -> (i32, i32, i32) {
    %c0_i32 = arith.constant 0 : i32
    %c0_i32_0 = arith.constant 0 : i32
    return %arg0, %c0_i32, %arg1 : i32, i32, i32
  }
  func.func @transform_2(%arg0: i32, %arg1: i32) -> (i32, i32, i32) {
    %c0_i32 = arith.constant 0 : i32
    %c0_i32_0 = arith.constant 0 : i32
    return %arg0, %c0_i32, %arg1 : i32, i32, i32
  }
  func.func @transform_3(%arg0: i32, %arg1: i32) -> (i32, i32, i32) {
    %c0_i32 = arith.constant 0 : i32
    %c0_i32_0 = arith.constant 0 : i32
    return %arg0, %c0_i32, %arg1 : i32, i32, i32
  }
}

</mosaic_0001>

<llo_original>
// kernel: sample_flow.1
$region0: #{sample_flow.1}
  #allocation0 [shape = 'u32[]', space=smem, size = 0x4, offset = 0x4, fixed_abs, tag = 'smem constant byte address 0x4 - core index']
  #allocation1 [shape = 'u32[144,128]{1,0:T(1,128)}', space=vmem, size = 0x12000, scoped, tag = 'internal scratch']
  %s0 = inlined_call_operand.hbm [shape: f32[2,2,256], index: 0, kind: input, shape index: {}]
  %s1 = inlined_call_operand.hbm [shape: f32[2,1,128], index: 1, kind: input, shape index: {}]
  %s2 = inlined_call_operand.hbm [shape: f32[2,1,128], index: 2, kind: input, shape index: {}]
  %s3 = inlined_call_operand.hbm [shape: f32[2,2,128], index: 3, kind: output, shape index: {}]
  %s4 = sld [smem:[#allocation0]]
  $region57: #{sample_flow.1} parent=0
    _
  %s6 = ssub.s32 1, %s4
  %s7 = scalar_select 0, %s6, %s4
  $region1: #{sample_flow.1} parent=0
    #allocation2 [shape = 'u8[4096]{0}', space=vmem, size = 0x1000, scoped, tag = 'input window, operand 0']
    #allocation3 [shape = 's32[2]{0}', space=sflag, size = 0x8, scoped, tag = 'scoped memory for sample_flow.1']
    #allocation4 [shape = 's32[2]{0}', space=sflag, size = 0x8, scoped, tag = 'scoped memory for sample_flow.1']
    #allocation5 [shape = 'u8[1024]{0}', space=vmem, size = 0x400, scoped, tag = 'input window, operand 1']
    #allocation6 [shape = 's32[2]{0}', space=sflag, size = 0x8, scoped, tag = 'scoped memory for sample_flow.1']
    #allocation7 [shape = 'u8[1024]{0}', space=vmem, size = 0x400, scoped, tag = 'input window, operand 2']
    #allocation8 [shape = 'u8[2048]{0}', space=vmem, size = 0x800, scoped, tag = 'output window, operand 0']
    %8 = vsyncpa [#allocation3], 0
    %s9 = scalar_lea.sflag [#allocation3], 1
    %10 = vsyncpa %s9, 0
    %11 = vsyncpa [#allocation6], 0
    %s12 = scalar_lea.sflag [#allocation6], 1
    %13 = vsyncpa %s12, 0
    %14 = vsyncpa [#allocation4], 0
    %s15 = scalar_lea.sflag [#allocation4], 1
    %16 = vsyncpa %s15, 0
    loop: start=0, step=1, limit=4
    $region2: #{sample_flow.1} parent=1 // loop_pre_header
      _
    $region3: #{sample_flow.1} parent=1 // loop_header
      %s18 = sphi 0, %s22
      %p19 = scmp.ge.s32.totalorder %s18, 4
      %s25 = sphi 0, %s37
      %s26 = sphi 0, %s33
      %s27 = sphi 0, %s25
      %s28 = sphi 0, %s26
      %s29 = sphi 0, %s27
      %s30 = sphi 0, %s28
      %s40 = sphi 0, %s42
      %s43 = sphi 0, %s40
      %s44 = sphi 0, %s43
      %s60 = sphi 0, %s44
      %s68 = sphi 0, %s70
      %s71 = sphi 0, %s68
      %s72 = sphi 0, %s71
      %s88 = sphi 0, %s72
      %s96 = sphi 0, %s98
      %s99 = sphi 0, %s96
      %s100 = sphi 0, %s99
      %s116 = sphi 0, %s100
      %s124 = sphi 0, %s126
      %s127 = sphi 0, %s124
      %s128 = sphi 0, %s127
      %s144 = sphi 0, %s128
    $region4: #{sample_flow.1} parent=1 // loop_header_branch
      %21 = sbr.rel (%p19) target = $region8
    $region5: #{sample_flow.1} parent=1 // loop_body
      %s23 = ssub.s32 %s18, 1
      %s24 = ssub.s32 %s18, 2
      %s31 = sadd.s32 1, %s26
      %p32 = scmp.ge.s32.totalorder %s31, 1
      %s33 = scalar_select %p32, 0, %s31
      %s34 = sadd.s32 1, %s25
      %s35 = scalar_select %p32, %s34, %s25
      %p36 = scmp.ge.s32.totalorder %s35, 2
      %s37 = scalar_select %p36, 0, %s35
      %s38 = ssub.s32 %s25, %s37
      %p39 = scmp.eq.s32.totalorder %s38, 0
      %s41 = sadd.s32 %s40, 1
      %s42 = scalar_select %p39, %s40, %s41
      %p45 = pneg %p39
      %p46 = scmp.eq.s32.totalorder %s18, 1
      %p47 = por %p45, %p46
      %p48 = scmp.ne.s32.totalorder %s40, %s43
      %p49 = scmp.eq.s32.totalorder %s18, 0
      %p50 = por %p48, %p49
      %p51 = scmp.ne.s32.totalorder %s40, %s43
      %p52 = scmp.eq.s32.totalorder %s23, 1
      %p53 = por %p51, %p52
      %p54 = scmp.ne.s32.totalorder %s43, %s44
      %p55 = scmp.eq.s32.totalorder %s23, 0
      %p56 = por %p54, %p55
      %p57 = scmp.ne.s32.totalorder %s43, %s44
      %p58 = scmp.eq.s32.totalorder %s24, 1
      %p59 = por %p57, %p58
      %p61 = scmp.ne.s32.totalorder %s44, %s60
      %p62 = scmp.eq.s32.totalorder %s24, 0
      %p63 = por %p61, %p62
      %s64 = ssub.s32 %s25, %s37
      %s65 = ssub.s32 %s26, %s33
      %s66 = sor.u32 %s64, %s65
      %p67 = scmp.eq.s32.totalorder %s66, 0
      %s69 = sadd.s32 %s68, 1
      %s70 = scalar_select %p67, %s68, %s69
      %p73 = pneg %p67
      %p74 = scmp.eq.s32.totalorder %s18, 1
      %p75 = por %p73, %p74
      %p76 = scmp.ne.s32.totalorder %s68, %s71
      %p77 = scmp.eq.s32.totalorder %s18, 0
      %p78 = por %p76, %p77
      %p79 = scmp.ne.s32.totalorder %s68, %s71
      %p80 = scmp.eq.s32.totalorder %s23, 1
      %p81 = por %p79, %p80
      %p82 = scmp.ne.s32.totalorder %s71, %s72
      %p83 = scmp.eq.s32.totalorder %s23, 0
      %p84 = por %p82, %p83
      %p85 = scmp.ne.s32.totalorder %s71, %s72
      %p86 = scmp.eq.s32.totalorder %s24, 1
      %p87 = por %p85, %p86
      %p89 = scmp.ne.s32.totalorder %s72, %s88
      %p90 = scmp.eq.s32.totalorder %s24, 0
      %p91 = por %p89, %p90
      %s92 = ssub.s32 %s25, %s37
      %s93 = ssub.s32 %s26, %s33
      %s94 = sor.u32 %s92, %s93
      %p95 = scmp.eq.s32.totalorder %s94, 0
      %s97 = sadd.s32 %s96, 1
      %s98 = scalar_select %p95, %s96, %s97
      %p101 = pneg %p95
      %p102 = scmp.eq.s32.totalorder %s18, 1
      %p103 = por %p101, %p102
      %p104 = scmp.ne.s32.totalorder %s96, %s99
      %p105 = scmp.eq.s32.totalorder %s18, 0
      %p106 = por %p104, %p105
      %p107 = scmp.ne.s32.totalorder %s96, %s99
      %p108 = scmp.eq.s32.totalorder %s23, 1
      %p109 = por %p107, %p108
      %p110 = scmp.ne.s32.totalorder %s99, %s100
      %p111 = scmp.eq.s32.totalorder %s23, 0
      %p112 = por %p110, %p111
      %p113 = scmp.ne.s32.totalorder %s99, %s100
      %p114 = scmp.eq.s32.totalorder %s24, 1
      %p115 = por %p113, %p114
      %p117 = scmp.ne.s32.totalorder %s100, %s116
      %p118 = scmp.eq.s32.totalorder %s24, 0
      %p119 = por %p117, %p118
      %s120 = ssub.s32 %s25, %s37
      %s121 = ssub.s32 %s26, %s33
      %s122 = sor.u32 %s120, %s121
      %p123 = scmp.eq.s32.totalorder %s122, 0
      %s125 = sadd.s32 %s124, 1
      %s126 = scalar_select %p123, %s124, %s125
      %p129 = pneg %p123
      %p130 = scmp.eq.s32.totalorder %s18, 1
      %p131 = por %p129, %p130
      %p132 = scmp.ne.s32.totalorder %s124, %s127
      %p133 = scmp.eq.s32.totalorder %s18, 0
      %p134 = por %p132, %p133
      %p135 = scmp.ne.s32.totalorder %s124, %s127
      %p136 = scmp.eq.s32.totalorder %s23, 1
      %p137 = por %p135, %p136
      %p138 = scmp.ne.s32.totalorder %s127, %s128
      %p139 = scmp.eq.s32.totalorder %s23, 0
      %p140 = por %p138, %p139
      %p141 = scmp.ne.s32.totalorder %s127, %s128
      %p142 = scmp.eq.s32.totalorder %s24, 1
      %p143 = por %p141, %p142
      %p145 = scmp.ne.s32.totalorder %s128, %s144
      %p146 = scmp.eq.s32.totalorder %s24, 0
      %p147 = por %p145, %p146
      %p148 = scmp.le.s32.totalorder 1, %s18
      %p149 = scmp.lt.s32.totalorder %s18, 3
      %p150 = pnand %p148, %p149
      %p151 = pneg %p150
      // Predicated region
      $region9: #{sample_flow.1} parent=5 // pred_check
        _
      $region10: #{sample_flow.1} parent=5 // pred_check_branch
        %153 = sbr.rel (%p150) target = $region12
      $region11: #{sample_flow.1} parent=5 // pred_region
        %s154 = ssub.s32 %s18, 1
      $region12: #{sample_flow.1} parent=5 // pred_fallthru
        _
      %p155 = scmp.lt.s32.totalorder %s18, 2
      // Predicated region
      $region13: #{sample_flow.1} parent=5 // pred_check
        %p156 = pneg %p155
      $region14: #{sample_flow.1} parent=5 // pred_check_branch
        %158 = sbr.rel (%p156) target = $region16
      $region15: #{sample_flow.1} parent=5 // pred_region
        // Predicated region
        $region17: #{sample_flow.1} parent=15 // pred_check
          %p159 = pneg %p50
        $region18: #{sample_flow.1} parent=15 // pred_check_branch
          %161 = sbr.rel (%p159) target = $region20
        $region19: #{sample_flow.1} parent=15 // pred_region
          %s162 = sand.u32 %s40, 1
          %s163 = scalar_lea.sflag [#allocation3], %s162
          %s164 = sand.u32 %s40, 1
          %s165 = smul.addr %s164, 4
          %s166 = scalar_lea.vmem [#allocation2], %s165
          %s168 = ssub.s32 64, 64
          %169 = vsyncadd %s163, %s168
          %s170 = smul.addr %s25, 2
          %s171 = smul.addr %s170, 32
          %s172 = scalar_lea.hbm %s0, %s171
          %s174 = sshll.u32 %s166, 4
          %s175 = int_to_ptr.vmem [resolvable:$true] %s174
          %177 = dma.hbm_to_vmem [thread:$0]  %s172, 64, %s175, %s163
        $region20: #{sample_flow.1} parent=15 // pred_fallthru
          _
        // Predicated region
        $region21: #{sample_flow.1} parent=15 // pred_check
          %p178 = pneg %p78
        $region22: #{sample_flow.1} parent=15 // pred_check_branch
          %180 = sbr.rel (%p178) target = $region24
        $region23: #{sample_flow.1} parent=15 // pred_region
          %s181 = sand.u32 %s18, 1
          %s182 = scalar_lea.sflag [#allocation6], %s181
          %s183 = sand.u32 %s68, 1
          %s184 = scalar_lea.vmem [#allocation5], %s183
          %s186 = ssub.s32 16, 16
          %187 = vsyncadd %s182, %s186
          %s188 = sadd.s32 %s26, %s25
          %s189 = smul.addr %s188, 16
          %s190 = scalar_lea.hbm %s1, %s189
          %s192 = sshll.u32 %s184, 4
          %s193 = int_to_ptr.vmem [resolvable:$true] %s192
          %195 = dma.hbm_to_vmem [thread:$0]  %s190, 16, %s193, %s182
        $region24: #{sample_flow.1} parent=15 // pred_fallthru
          _
        // Predicated region
        $region25: #{sample_flow.1} parent=15 // pred_check
          %p196 = pneg %p106
        $region26: #{sample_flow.1} parent=15 // pred_check_branch
          %198 = sbr.rel (%p196) target = $region28
        $region27: #{sample_flow.1} parent=15 // pred_region
          %s199 = sand.u32 %s18, 1
          %s200 = scalar_lea.sflag [#allocation6], %s199
          %s201 = sand.u32 %s96, 1
          %s202 = scalar_lea.vmem [#allocation7], %s201
          %s204 = ssub.s32 16, 16
          %205 = vsyncadd %s200, %s204
          %s206 = sadd.s32 %s26, %s25
          %s207 = smul.addr %s206, 16
          %s208 = scalar_lea.hbm %s2, %s207
          %s210 = sshll.u32 %s202, 4
          %s211 = int_to_ptr.vmem [resolvable:$true] %s210
          %213 = dma.hbm_to_vmem [thread:$0]  %s208, 16, %s211, %s200
        $region28: #{sample_flow.1} parent=15 // pred_fallthru
          _
      $region16: #{sample_flow.1} parent=5 // pred_fallthru
        _
      %p214 = scmp.le.s32.totalorder 1, %s18
      %p215 = scmp.lt.s32.totalorder %s18, 3
      %p216 = pnand %p214, %p215
      %p217 = pneg %p216
      // Predicated region
      $region29: #{sample_flow.1} parent=5 // pred_check
        _
      $region30: #{sample_flow.1} parent=5 // pred_check_branch
        %219 = sbr.rel (%p216) target = $region32
      $region31: #{sample_flow.1} parent=5 // pred_region
        %s220 = ssub.s32 %s18, 1
        %s221 = sand.u32 %s43, 1
        %s222 = scalar_lea.sflag [#allocation3], %s221
        %s223 = sand.u32 %s43, 1
        %s224 = smul.addr %s223, 4
        %s225 = scalar_lea.vmem [#allocation2], %s224
        // Predicated region
        $region33: #{sample_flow.1} parent=31 // pred_check
          %p226 = pneg %p56
        $region34: #{sample_flow.1} parent=31 // pred_check_branch
          %228 = sbr.rel (%p226) target = $region36
        $region35: #{sample_flow.1} parent=31 // pred_region
          %229 = dma.done %s222, 64
        $region36: #{sample_flow.1} parent=31 // pred_fallthru
          _
        %s230 = sand.u32 %s23, 1
        %s231 = scalar_lea.sflag [#allocation6], %s230
        %s232 = sand.u32 %s71, 1
        %s233 = scalar_lea.vmem [#allocation5], %s232
        // Predicated region
        $region37: #{sample_flow.1} parent=31 // pred_check
          %p234 = pneg %p84
        $region38: #{sample_flow.1} parent=31 // pred_check_branch
          %236 = sbr.rel (%p234) target = $region40
        $region39: #{sample_flow.1} parent=31 // pred_region
          %237 = dma.done %s231, 16
        $region40: #{sample_flow.1} parent=31 // pred_fallthru
          _
        %s238 = sand.u32 %s23, 1
        %s239 = scalar_lea.sflag [#allocation6], %s238
        %s240 = sand.u32 %s99, 1
        %s241 = scalar_lea.vmem [#allocation7], %s240
        // Predicated region
        $region41: #{sample_flow.1} parent=31 // pred_check
          %p242 = pneg %p112
        $region42: #{sample_flow.1} parent=31 // pred_check_branch
          %244 = sbr.rel (%p242) target = $region44
        $region43: #{sample_flow.1} parent=31 // pred_region
          %245 = dma.done %s239, 16
        $region44: #{sample_flow.1} parent=31 // pred_fallthru
          _
        %s246 = sand.u32 %s43, 1
        %s247 = scalar_lea.sflag [#allocation3], %s246
        %s248 = sand.u32 %s43, 1
        %s249 = smul.addr %s248, 4
        %s250 = scalar_lea.vmem [#allocation2], %s249
        %p251 = pneg %p56
        %p252 = pneg %p53
        %s253 = sand.u32 %s23, 1
        %s254 = scalar_lea.sflag [#allocation6], %s253
        %s255 = sand.u32 %s71, 1
        %s256 = scalar_lea.vmem [#allocation5], %s255
        %p257 = pneg %p84
        %p258 = pneg %p81
        %s259 = sand.u32 %s23, 1
        %s260 = scalar_lea.sflag [#allocation6], %s259
        %s261 = sand.u32 %s99, 1
        %s262 = scalar_lea.vmem [#allocation7], %s261
        %p263 = pneg %p112
        %p264 = pneg %p109
        %p265 = pneg %p140
        %p266 = pneg %p137
        %s267 = sand.u32 %s127, 1
        %s268 = scalar_lea.sflag [#allocation4], %s267
        %s269 = sand.u32 %s127, 1
        %s270 = smul.addr %s269, 2
        %s271 = scalar_lea.vmem [#allocation8], %s270
        %v273 = vld [vmem:[%s225] sm:$0xf]
        %v276 = vunpack.c.l.s4 1983009808
        %v277 = vunpack.c.0.s8 %v276
        %v278 = vlaneseq
        %v279 = vshrl.u32 %v278, 7
        %v280 = vsub.s32 %v277, %v279
        %v281 = vrot.slane %v273, %v280
        %v282 = vcombine.high %v281, %v281
        %v285 = vpack.c.bf16 %v281, %v281
        %v286 = vpack.c.bf16 %v282, %v282
        %v287 = vld [vmem:[%s233] sm:$0x1]
        %v288 = vld [vmem:[%s241] sm:$0x1]
        %v289 = vfloor.f32 %v287
        %v290 = vfloor.f32 %v288
        %v291 = vsub.f32 %v287, %v289
        %v292 = vsub.f32 %v288, %v290
        %v293 = vcvt.f32.s32.to.zero.pseudo %v289
        %v294 = vcvt.f32.s32.to.zero.pseudo %v290
        %v295 = vlaneseq
        %v296 = vshrl.u32 %v295, 7
        %v297 = vadd.s32 %v296, 8
        %v298 = vadd.s32 %v296, 16
        %v299 = vadd.s32 %v296, 24
        %v300 = vadd.s32 %v296, 32
        %v301 = vadd.s32 %v296, 40
        %v302 = vadd.s32 %v296, 48
        %v303 = vadd.s32 %v296, 56
        %v304 = vadd.s32 %v296, 64
        %v305 = vadd.s32 %v296, 72
        %v306 = vadd.s32 %v296, 80
        %v307 = vadd.s32 %v296, 88
        %v308 = vadd.s32 %v296, 96
        %v309 = vadd.s32 %v296, 104
        %v310 = vadd.s32 %v296, 112
        %v311 = vadd.s32 %v296, 120
        %v312 = vadd.s32 %v296, 128
        %v313 = vadd.s32 %v296, 136
        %v314 = vadd.s32 %v296, 144
        %v315 = vadd.s32 %v296, 152
        %v316 = vadd.s32 %v296, 160
        %v317 = vadd.s32 %v296, 168
        %v318 = vadd.s32 %v296, 176
        %v319 = vadd.s32 %v296, 184
        %v320 = vadd.s32 %v296, 192
        %v321 = vadd.s32 %v296, 200
        %v322 = vadd.s32 %v296, 208
        %v323 = vadd.s32 %v296, 216
        %v324 = vadd.s32 %v296, 224
        %v325 = vadd.s32 %v296, 232
        %v326 = vadd.s32 %v296, 240
        %v327 = vadd.s32 %v296, 248
        %v328 = vsub.f32 1.0, %v291
        %v329 = vsub.f32 1.0, %v292
        %vm330 = vcmp.ge.s32.totalorder %v293, 0
        %vm331 = vcmp.le.s32.totalorder %v293, 15
        %vm332 = vmand %vm330, %vm331
        %vm333 = vcmp.ge.s32.totalorder %v294, 0
        %vm334 = vmand %vm332, %vm333
        %vm335 = vcmp.le.s32.totalorder %v294, 15
        %vm336 = vmand %vm334, %vm335
        %v337 = vsel %vm336, 1, 0
        %v338 = vcvt.s32.f32 %v337
        %v339 = vmul.u32 %v293, 16
        %v340 = vadd.s32 %v339, %v294
        %v341 = vmul.f32 %v328, %v329
        %v342 = vmul.f32 %v341, %v338
        %v343 = vadd.s32 %v294, 1
        %vm344 = vcmp.ge.s32.totalorder %v343, 0
        %vm345 = vmand %vm332, %vm344
        %vm346 = vcmp.le.s32.totalorder %v343, 15
        %vm347 = vmand %vm345, %vm346
        %v348 = vsel %vm347, 1, 0
        %v349 = vcvt.s32.f32 %v348
        %v350 = vadd.s32 %v339, %v343
        %v351 = vmul.f32 %v328, %v292
        %v352 = vmul.f32 %v351, %v349
        %v353 = vadd.s32 %v293, 1
        %vm354 = vcmp.ge.s32.totalorder %v353, 0
        %vm355 = vcmp.le.s32.totalorder %v353, 15
        %vm356 = vmand %vm354, %vm355
        %vm357 = vmand %vm356, %vm333
        %vm358 = vmand %vm357, %vm335
        %v359 = vsel %vm358, 1, 0
        %v360 = vcvt.s32.f32 %v359
        %v361 = vmul.u32 %v353, 16
        %v362 = vadd.s32 %v361, %v294
        %v363 = vmul.f32 %v291, %v329
        %v364 = vmul.f32 %v363, %v360
        %vm365 = vmand %vm356, %vm344
        %vm366 = vmand %vm365, %vm346
        %v367 = vsel %vm366, 1, 0
        %v368 = vcvt.s32.f32 %v367
        %v369 = vadd.s32 %v361, %v343
        %v370 = vmul.f32 %v291, %v292
        %v371 = vmul.f32 %v370, %v368
        %v372 = vlaneseq
        %v373 = vshrl.u32 %v372, 7
        %v374 = vsub.s32 0, %v373
        %v375 = vrot.slane %v340, %v374
        %vm376 = vcmp.eq.s32.totalorder %v296, %v375
        %vm377 = vcmp.eq.s32.totalorder %v297, %v375
        %vm378 = vcmp.eq.s32.totalorder %v298, %v375
        %vm379 = vcmp.eq.s32.totalorder %v299, %v375
        %vm380 = vcmp.eq.s32.totalorder %v300, %v375
        %vm381 = vcmp.eq.s32.totalorder %v301, %v375
        %vm382 = vcmp.eq.s32.totalorder %v302, %v375
        %vm383 = vcmp.eq.s32.totalorder %v303, %v375
        %vm384 = vcmp.eq.s32.totalorder %v304, %v375
        %vm385 = vcmp.eq.s32.totalorder %v305, %v375
        %vm386 = vcmp.eq.s32.totalorder %v306, %v375
        %vm387 = vcmp.eq.s32.totalorder %v307, %v375
        %vm388 = vcmp.eq.s32.totalorder %v308, %v375
        %vm389 = vcmp.eq.s32.totalorder %v309, %v375
        %vm390 = vcmp.eq.s32.totalorder %v310, %v375
        %vm391 = vcmp.eq.s32.totalorder %v311, %v375
        %vm392 = vcmp.eq.s32.totalorder %v312, %v375
        %vm393 = vcmp.eq.s32.totalorder %v313, %v375
        %vm394 = vcmp.eq.s32.totalorder %v314, %v375
        %vm395 = vcmp.eq.s32.totalorder %v315, %v375
        %vm396 = vcmp.eq.s32.totalorder %v316, %v375
        %vm397 = vcmp.eq.s32.totalorder %v317, %v375
        %vm398 = vcmp.eq.s32.totalorder %v318, %v375
        %vm399 = vcmp.eq.s32.totalorder %v319, %v375
        %vm400 = vcmp.eq.s32.totalorder %v320, %v375
        %vm401 = vcmp.eq.s32.totalorder %v321, %v375
        %vm402 = vcmp.eq.s32.totalorder %v322, %v375
        %vm403 = vcmp.eq.s32.totalorder %v323, %v375
        %vm404 = vcmp.eq.s32.totalorder %v324, %v375
        %vm405 = vcmp.eq.s32.totalorder %v325, %v375
        %vm406 = vcmp.eq.s32.totalorder %v326, %v375
        %vm407 = vcmp.eq.s32.totalorder %v327, %v375
        %v408 = vsel %vm376, 1.0, 0.0
        %v409 = vsel %vm377, 1.0, 0.0
        %v410 = vsel %vm378, 1.0, 0.0
        %v411 = vsel %vm379, 1.0, 0.0
        %v412 = vsel %vm380, 1.0, 0.0
        %v413 = vsel %vm381, 1.0, 0.0
        %v414 = vsel %vm382, 1.0, 0.0
        %v415 = vsel %vm383, 1.0, 0.0
        %v416 = vsel %vm384, 1.0, 0.0
        %v417 = vsel %vm385, 1.0, 0.0
        %v418 = vsel %vm386, 1.0, 0.0
        %v419 = vsel %vm387, 1.0, 0.0
        %v420 = vsel %vm388, 1.0, 0.0
        %v421 = vsel %vm389, 1.0, 0.0
        %v422 = vsel %vm390, 1.0, 0.0
        %v423 = vsel %vm391, 1.0, 0.0
        %v424 = vsel %vm392, 1.0, 0.0
        %v425 = vsel %vm393, 1.0, 0.0
        %v426 = vsel %vm394, 1.0, 0.0
        %v427 = vsel %vm395, 1.0, 0.0
        %v428 = vsel %vm396, 1.0, 0.0
        %v429 = vsel %vm397, 1.0, 0.0
        %v430 = vsel %vm398, 1.0, 0.0
        %v431 = vsel %vm399, 1.0, 0.0
        %v432 = vsel %vm400, 1.0, 0.0
        %v433 = vsel %vm401, 1.0, 0.0
        %v434 = vsel %vm402, 1.0, 0.0
        %v435 = vsel %vm403, 1.0, 0.0
        %v436 = vsel %vm404, 1.0, 0.0
        %v437 = vsel %vm405, 1.0, 0.0
        %v438 = vsel %vm406, 1.0, 0.0
        %v439 = vsel %vm407, 1.0, 0.0
        %v440 = vpack.c.bf16 %v409, %v408
        %v441 = vpack.c.bf16 %v411, %v410
        %v442 = vpack.c.bf16 %v413, %v412
        %v443 = vpack.c.bf16 %v415, %v414
        %v444 = vpack.c.bf16 %v417, %v416
        %v445 = vpack.c.bf16 %v419, %v418
        %v446 = vpack.c.bf16 %v421, %v420
        %v447 = vpack.c.bf16 %v423, %v422
        %v448 = vpack.c.bf16 %v425, %v424
        %v449 = vpack.c.bf16 %v427, %v426
        %v450 = vpack.c.bf16 %v429, %v428
        %v451 = vpack.c.bf16 %v431, %v430
        %v452 = vpack.c.bf16 %v433, %v432
        %v453 = vpack.c.bf16 %v435, %v434
        %v454 = vpack.c.bf16 %v437, %v436
        %v455 = vpack.c.bf16 %v439, %v438
        %456 = vmatprep.subr.bf16.mxu0 0
        %457 = vmatpush1.bf16.msra.mxu0 %v440
        %458 = vmatprep.subr.bf16.mxu0 0
        %459 = vmatpush1.bf16.msra.mxu0 %v441
        %460 = vmatprep.subr.bf16.mxu0 0
        %461 = vmatpush1.bf16.msra.mxu0 %v442
        %462 = vmatprep.subr.bf16.mxu0 0
        %463 = vmatpush1.bf16.msra.mxu0 %v443
        %464 = vmatprep.subr.bf16.mxu0 0
        %465 = vmatpush1.bf16.msra.mxu0 %v444
        %466 = vmatprep.subr.bf16.mxu0 0
        %467 = vmatpush1.bf16.msra.mxu0 %v445
        %468 = vmatprep.subr.bf16.mxu0 0
        %469 = vmatpush1.bf16.msra.mxu0 %v446
        %470 = vmatprep.subr.bf16.mxu0 0
        %471 = vmatpush1.bf16.msra.mxu0 %v447
        %472 = vmatprep.subr.bf16.mxu0 0
        %473 = vmatpush1.bf16.msra.mxu0 %v448
        %474 = vmatprep.subr.bf16.mxu0 0
        %475 = vmatpush1.bf16.msra.mxu0 %v449
        %476 = vmatprep.subr.bf16.mxu0 0
        %477 = vmatpush1.bf16.msra.mxu0 %v450
        %478 = vmatprep.subr.bf16.mxu0 0
        %479 = vmatpush1.bf16.msra.mxu0 %v451
        %480 = vmatprep.subr.bf16.mxu0 0
        %481 = vmatpush1.bf16.msra.mxu0 %v452
        %482 = vmatprep.subr.bf16.mxu0 0
        %483 = vmatpush1.bf16.msra.mxu0 %v453
        %484 = vmatprep.subr.bf16.mxu0 0
        %485 = vmatpush1.bf16.msra.mxu0 %v454
        %486 = vmatprep.subr.bf16.mxu0 0
        %487 = vmatpush1.bf16.msra.mxu0 %v455
        %488 = vmatprep.mubr.bf16.mxu0 %v286
        %489 = vmatmul.mubr.bf16.gmra.mrb[0].mxu0 %v285
        %v490 = vpop.f32.mrb[0].mxu0
        %v491 = vadd.f32 0.0, %v490
        %v492 = vpop.f32.mrb[0].mxu0
        %v493 = vpop.f32.mrb[0].mxu0
        %v494 = vpop.f32.mrb[0].mxu0
        %495 = vdwg.mxu0
        %v497 = vlaneseq
        %v498 = vshrl.u32 %v497, 7
        %v499 = vsub.s32 0, %v498
        %v500 = vrot.slane %v342, %v499
        %v502 = vmul.f32 %v491, %v500
        %v503 = vadd.f32 %v502, 0.0
        %v504 = vlaneseq
        %v505 = vshrl.u32 %v504, 7
        %v506 = vsub.s32 0, %v505
        %v507 = vrot.slane %v350, %v506
        %vm508 = vcmp.eq.s32.totalorder %v296, %v507
        %vm509 = vcmp.eq.s32.totalorder %v297, %v507
        %vm510 = vcmp.eq.s32.totalorder %v298, %v507
        %vm511 = vcmp.eq.s32.totalorder %v299, %v507
        %vm512 = vcmp.eq.s32.totalorder %v300, %v507
        %vm513 = vcmp.eq.s32.totalorder %v301, %v507
        %vm514 = vcmp.eq.s32.totalorder %v302, %v507
        %vm515 = vcmp.eq.s32.totalorder %v303, %v507
        %vm516 = vcmp.eq.s32.totalorder %v304, %v507
        %vm517 = vcmp.eq.s32.totalorder %v305, %v507
        %vm518 = vcmp.eq.s32.totalorder %v306, %v507
        %vm519 = vcmp.eq.s32.totalorder %v307, %v507
        %vm520 = vcmp.eq.s32.totalorder %v308, %v507
        %vm521 = vcmp.eq.s32.totalorder %v309, %v507
        %vm522 = vcmp.eq.s32.totalorder %v310, %v507
        %vm523 = vcmp.eq.s32.totalorder %v311, %v507
        %vm524 = vcmp.eq.s32.totalorder %v312, %v507
        %vm525 = vcmp.eq.s32.totalorder %v313, %v507
        %vm526 = vcmp.eq.s32.totalorder %v314, %v507
        %vm527 = vcmp.eq.s32.totalorder %v315, %v507
        %vm528 = vcmp.eq.s32.totalorder %v316, %v507
        %vm529 = vcmp.eq.s32.totalorder %v317, %v507
        %vm530 = vcmp.eq.s32.totalorder %v318, %v507
        %vm531 = vcmp.eq.s32.totalorder %v319, %v507
        %vm532 = vcmp.eq.s32.totalorder %v320, %v507
        %vm533 = vcmp.eq.s32.totalorder %v321, %v507
        %vm534 = vcmp.eq.s32.totalorder %v322, %v507
        %vm535 = vcmp.eq.s32.totalorder %v323, %v507
        %vm536 = vcmp.eq.s32.totalorder %v324, %v507
        %vm537 = vcmp.eq.s32.totalorder %v325, %v507
        %vm538 = vcmp.eq.s32.totalorder %v326, %v507
        %vm539 = vcmp.eq.s32.totalorder %v327, %v507
        %v540 = vsel %vm508, 1.0, 0.0
        %v541 = vsel %vm509, 1.0, 0.0
        %v542 = vsel %vm510, 1.0, 0.0
        %v543 = vsel %vm511, 1.0, 0.0
        %v544 = vsel %vm512, 1.0, 0.0
        %v545 = vsel %vm513, 1.0, 0.0
        %v546 = vsel %vm514, 1.0, 0.0
        %v547 = vsel %vm515, 1.0, 0.0
        %v548 = vsel %vm516, 1.0, 0.0
        %v549 = vsel %vm517, 1.0, 0.0
        %v550 = vsel %vm518, 1.0, 0.0
        %v551 = vsel %vm519, 1.0, 0.0
        %v552 = vsel %vm520, 1.0, 0.0
        %v553 = vsel %vm521, 1.0, 0.0
        %v554 = vsel %vm522, 1.0, 0.0
        %v555 = vsel %vm523, 1.0, 0.0
        %v556 = vsel %vm524, 1.0, 0.0
        %v557 = vsel %vm525, 1.0, 0.0
        %v558 = vsel %vm526, 1.0, 0.0
        %v559 = vsel %vm527, 1.0, 0.0
        %v560 = vsel %vm528, 1.0, 0.0
        %v561 = vsel %vm529, 1.0, 0.0
        %v562 = vsel %vm530, 1.0, 0.0
        %v563 = vsel %vm531, 1.0, 0.0
        %v564 = vsel %vm532, 1.0, 0.0
        %v565 = vsel %vm533, 1.0, 0.0
        %v566 = vsel %vm534, 1.0, 0.0
        %v567 = vsel %vm535, 1.0, 0.0
        %v568 = vsel %vm536, 1.0, 0.0
        %v569 = vsel %vm537, 1.0, 0.0
        %v570 = vsel %vm538, 1.0, 0.0
        %v571 = vsel %vm539, 1.0, 0.0
        %v572 = vpack.c.bf16 %v541, %v540
        %v573 = vpack.c.bf16 %v543, %v542
        %v574 = vpack.c.bf16 %v545, %v544
        %v575 = vpack.c.bf16 %v547, %v546
        %v576 = vpack.c.bf16 %v549, %v548
        %v577 = vpack.c.bf16 %v551, %v550
        %v578 = vpack.c.bf16 %v553, %v552
        %v579 = vpack.c.bf16 %v555, %v554
        %v580 = vpack.c.bf16 %v557, %v556
        %v581 = vpack.c.bf16 %v559, %v558
        %v582 = vpack.c.bf16 %v561, %v560
        %v583 = vpack.c.bf16 %v563, %v562
        %v584 = vpack.c.bf16 %v565, %v564
        %v585 = vpack.c.bf16 %v567, %v566
        %v586 = vpack.c.bf16 %v569, %v568
        %v587 = vpack.c.bf16 %v571, %v570
        %588 = vmatprep.subr.bf16.mxu0 0
        %589 = vmatpush1.bf16.msra.mxu0 %v572
        %590 = vmatprep.subr.bf16.mxu0 0
        %591 = vmatpush1.bf16.msra.mxu0 %v573
        %592 = vmatprep.subr.bf16.mxu0 0
        %593 = vmatpush1.bf16.msra.mxu0 %v574
        %594 = vmatprep.subr.bf16.mxu0 0
        %595 = vmatpush1.bf16.msra.mxu0 %v575
        %596 = vmatprep.subr.bf16.mxu0 0
        %597 = vmatpush1.bf16.msra.mxu0 %v576
        %598 = vmatprep.subr.bf16.mxu0 0
        %599 = vmatpush1.bf16.msra.mxu0 %v577
        %600 = vmatprep.subr.bf16.mxu0 0
        %601 = vmatpush1.bf16.msra.mxu0 %v578
        %602 = vmatprep.subr.bf16.mxu0 0
        %603 = vmatpush1.bf16.msra.mxu0 %v579
        %604 = vmatprep.subr.bf16.mxu0 0
        %605 = vmatpush1.bf16.msra.mxu0 %v580
        %606 = vmatprep.subr.bf16.mxu0 0
        %607 = vmatpush1.bf16.msra.mxu0 %v581
        %608 = vmatprep.subr.bf16.mxu0 0
        %609 = vmatpush1.bf16.msra.mxu0 %v582
        %610 = vmatprep.subr.bf16.mxu0 0
        %611 = vmatpush1.bf16.msra.mxu0 %v583
        %612 = vmatprep.subr.bf16.mxu0 0
        %613 = vmatpush1.bf16.msra.mxu0 %v584
        %614 = vmatprep.subr.bf16.mxu0 0
        %615 = vmatpush1.bf16.msra.mxu0 %v585
        %616 = vmatprep.subr.bf16.mxu0 0
        %617 = vmatpush1.bf16.msra.mxu0 %v586
        %618 = vmatprep.subr.bf16.mxu0 0
        %619 = vmatpush1.bf16.msra.mxu0 %v587
        %620 = vmatprep.mubr.bf16.mxu0 %v286
        %621 = vmatmul.mubr.bf16.gmra.mrb[0].mxu0 %v285
        %v622 = vpop.f32.mrb[0].mxu0
        %v623 = vadd.f32 0.0, %v622
        %v624 = vpop.f32.mrb[0].mxu0
        %v625 = vpop.f32.mrb[0].mxu0
        %v626 = vpop.f32.mrb[0].mxu0
        %627 = vdwg.mxu0
        %v629 = vlaneseq
        %v630 = vshrl.u32 %v629, 7
        %v631 = vsub.s32 0, %v630
        %v632 = vrot.slane %v352, %v631
        %v634 = vmul.f32 %v623, %v632
        %v635 = vadd.f32 %v503, %v634
        %v636 = vlaneseq
        %v637 = vshrl.u32 %v636, 7
        %v638 = vsub.s32 0, %v637
        %v639 = vrot.slane %v362, %v638
        %vm640 = vcmp.eq.s32.totalorder %v296, %v639
        %vm641 = vcmp.eq.s32.totalorder %v297, %v639
        %vm642 = vcmp.eq.s32.totalorder %v298, %v639
        %vm643 = vcmp.eq.s32.totalorder %v299, %v639
        %vm644 = vcmp.eq.s32.totalorder %v300, %v639
        %vm645 = vcmp.eq.s32.totalorder %v301, %v639
        %vm646 = vcmp.eq.s32.totalorder %v302, %v639
        %vm647 = vcmp.eq.s32.totalorder %v303, %v639
        %vm648 = vcmp.eq.s32.totalorder %v304, %v639
        %vm649 = vcmp.eq.s32.totalorder %v305, %v639
        %vm650 = vcmp.eq.s32.totalorder %v306, %v639
        %vm651 = vcmp.eq.s32.totalorder %v307, %v639
        %vm652 = vcmp.eq.s32.totalorder %v308, %v639
        %vm653 = vcmp.eq.s32.totalorder %v309, %v639
        %vm654 = vcmp.eq.s32.totalorder %v310, %v639
        %vm655 = vcmp.eq.s32.totalorder %v311, %v639
        %vm656 = vcmp.eq.s32.totalorder %v312, %v639
        %vm657 = vcmp.eq.s32.totalorder %v313, %v639
        %vm658 = vcmp.eq.s32.totalorder %v314, %v639
        %vm659 = vcmp.eq.s32.totalorder %v315, %v639
        %vm660 = vcmp.eq.s32.totalorder %v316, %v639
        %vm661 = vcmp.eq.s32.totalorder %v317, %v639
        %vm662 = vcmp.eq.s32.totalorder %v318, %v639
        %vm663 = vcmp.eq.s32.totalorder %v319, %v639
        %vm664 = vcmp.eq.s32.totalorder %v320, %v639
        %vm665 = vcmp.eq.s32.totalorder %v321, %v639
        %vm666 = vcmp.eq.s32.totalorder %v322, %v639
        %vm667 = vcmp.eq.s32.totalorder %v323, %v639
        %vm668 = vcmp.eq.s32.totalorder %v324, %v639
        %vm669 = vcmp.eq.s32.totalorder %v325, %v639
        %vm670 = vcmp.eq.s32.totalorder %v326, %v639
        %vm671 = vcmp.eq.s32.totalorder %v327, %v639
        %v672 = vsel %vm640, 1.0, 0.0
        %v673 = vsel %vm641, 1.0, 0.0
        %v674 = vsel %vm642, 1.0, 0.0
        %v675 = vsel %vm643, 1.0, 0.0
        %v676 = vsel %vm644, 1.0, 0.0
        %v677 = vsel %vm645, 1.0, 0.0
        %v678 = vsel %vm646, 1.0, 0.0
        %v679 = vsel %vm647, 1.0, 0.0
        %v680 = vsel %vm648, 1.0, 0.0
        %v681 = vsel %vm649, 1.0, 0.0
        %v682 = vsel %vm650, 1.0, 0.0
        %v683 = vsel %vm651, 1.0, 0.0
        %v684 = vsel %vm652, 1.0, 0.0
        %v685 = vsel %vm653, 1.0, 0.0
        %v686 = vsel %vm654, 1.0, 0.0
        %v687 = vsel %vm655, 1.0, 0.0
        %v688 = vsel %vm656, 1.0, 0.0
        %v689 = vsel %vm657, 1.0, 0.0
        %v690 = vsel %vm658, 1.0, 0.0
        %v691 = vsel %vm659, 1.0, 0.0
        %v692 = vsel %vm660, 1.0, 0.0
        %v693 = vsel %vm661, 1.0, 0.0
        %v694 = vsel %vm662, 1.0, 0.0
        %v695 = vsel %vm663, 1.0, 0.0
        %v696 = vsel %vm664, 1.0, 0.0
        %v697 = vsel %vm665, 1.0, 0.0
        %v698 = vsel %vm666, 1.0, 0.0
        %v699 = vsel %vm667, 1.0, 0.0
        %v700 = vsel %vm668, 1.0, 0.0
        %v701 = vsel %vm669, 1.0, 0.0
        %v702 = vsel %vm670, 1.0, 0.0
        %v703 = vsel %vm671, 1.0, 0.0
        %v704 = vpack.c.bf16 %v673, %v672
        %v705 = vpack.c.bf16 %v675, %v674
        %v706 = vpack.c.bf16 %v677, %v676
        %v707 = vpack.c.bf16 %v679, %v678
        %v708 = vpack.c.bf16 %v681, %v680
        %v709 = vpack.c.bf16 %v683, %v682
        %v710 = vpack.c.bf16 %v685, %v684
        %v711 = vpack.c.bf16 %v687, %v686
        %v712 = vpack.c.bf16 %v689, %v688
        %v713 = vpack.c.bf16 %v691, %v690
        %v714 = vpack.c.bf16 %v693, %v692
        %v715 = vpack.c.bf16 %v695, %v694
        %v716 = vpack.c.bf16 %v697, %v696
        %v717 = vpack.c.bf16 %v699, %v698
        %v718 = vpack.c.bf16 %v701, %v700
        %v719 = vpack.c.bf16 %v703, %v702
        %720 = vmatprep.subr.bf16.mxu0 0
        %721 = vmatpush1.bf16.msra.mxu0 %v704
        %722 = vmatprep.subr.bf16.mxu0 0
        %723 = vmatpush1.bf16.msra.mxu0 %v705
        %724 = vmatprep.subr.bf16.mxu0 0
        %725 = vmatpush1.bf16.msra.mxu0 %v706
        %726 = vmatprep.subr.bf16.mxu0 0
        %727 = vmatpush1.bf16.msra.mxu0 %v707
        %728 = vmatprep.subr.bf16.mxu0 0
        %729 = vmatpush1.bf16.msra.mxu0 %v708
        %730 = vmatprep.subr.bf16.mxu0 0
        %731 = vmatpush1.bf16.msra.mxu0 %v709
        %732 = vmatprep.subr.bf16.mxu0 0
        %733 = vmatpush1.bf16.msra.mxu0 %v710
        %734 = vmatprep.subr.bf16.mxu0 0
        %735 = vmatpush1.bf16.msra.mxu0 %v711
        %736 = vmatprep.subr.bf16.mxu0 0
        %737 = vmatpush1.bf16.msra.mxu0 %v712
        %738 = vmatprep.subr.bf16.mxu0 0
        %739 = vmatpush1.bf16.msra.mxu0 %v713
        %740 = vmatprep.subr.bf16.mxu0 0
        %741 = vmatpush1.bf16.msra.mxu0 %v714
        %742 = vmatprep.subr.bf16.mxu0 0
        %743 = vmatpush1.bf16.msra.mxu0 %v715
        %744 = vmatprep.subr.bf16.mxu0 0
        %745 = vmatpush1.bf16.msra.mxu0 %v716
        %746 = vmatprep.subr.bf16.mxu0 0
        %747 = vmatpush1.bf16.msra.mxu0 %v717
        %748 = vmatprep.subr.bf16.mxu0 0
        %749 = vmatpush1.bf16.msra.mxu0 %v718
        %750 = vmatprep.subr.bf16.mxu0 0
        %751 = vmatpush1.bf16.msra.mxu0 %v719
        %752 = vmatprep.mubr.bf16.mxu0 %v286
        %753 = vmatmul.mubr.bf16.gmra.mrb[0].mxu0 %v285
        %v754 = vpop.f32.mrb[0].mxu0
        %v755 = vadd.f32 0.0, %v754
        %v756 = vpop.f32.mrb[0].mxu0
        %v757 = vpop.f32.mrb[0].mxu0
        %v758 = vpop.f32.mrb[0].mxu0
        %759 = vdwg.mxu0
        %v761 = vlaneseq
        %v762 = vshrl.u32 %v761, 7
        %v763 = vsub.s32 0, %v762
        %v764 = vrot.slane %v364, %v763
        %v766 = vmul.f32 %v755, %v764
        %v767 = vadd.f32 %v635, %v766
        %v768 = vlaneseq
        %v769 = vshrl.u32 %v768, 7
        %v770 = vsub.s32 0, %v769
        %v771 = vrot.slane %v369, %v770
        %vm772 = vcmp.eq.s32.totalorder %v296, %v771
        %vm773 = vcmp.eq.s32.totalorder %v297, %v771
        %vm774 = vcmp.eq.s32.totalorder %v298, %v771
        %vm775 = vcmp.eq.s32.totalorder %v299, %v771
        %vm776 = vcmp.eq.s32.totalorder %v300, %v771
        %vm777 = vcmp.eq.s32.totalorder %v301, %v771
        %vm778 = vcmp.eq.s32.totalorder %v302, %v771
        %vm779 = vcmp.eq.s32.totalorder %v303, %v771
        %vm780 = vcmp.eq.s32.totalorder %v304, %v771
        %vm781 = vcmp.eq.s32.totalorder %v305, %v771
        %vm782 = vcmp.eq.s32.totalorder %v306, %v771
        %vm783 = vcmp.eq.s32.totalorder %v307, %v771
        %vm784 = vcmp.eq.s32.totalorder %v308, %v771
        %vm785 = vcmp.eq.s32.totalorder %v309, %v771
        %vm786 = vcmp.eq.s32.totalorder %v310, %v771
        %vm787 = vcmp.eq.s32.totalorder %v311, %v771
        %vm788 = vcmp.eq.s32.totalorder %v312, %v771
        %vm789 = vcmp.eq.s32.totalorder %v313, %v771
        %vm790 = vcmp.eq.s32.totalorder %v314, %v771
        %vm791 = vcmp.eq.s32.totalorder %v315, %v771
        %vm792 = vcmp.eq.s32.totalorder %v316, %v771
        %vm793 = vcmp.eq.s32.totalorder %v317, %v771
        %vm794 = vcmp.eq.s32.totalorder %v318, %v771
        %vm795 = vcmp.eq.s32.totalorder %v319, %v771
        %vm796 = vcmp.eq.s32.totalorder %v320, %v771
        %vm797 = vcmp.eq.s32.totalorder %v321, %v771
        %vm798 = vcmp.eq.s32.totalorder %v322, %v771
        %vm799 = vcmp.eq.s32.totalorder %v323, %v771
        %vm800 = vcmp.eq.s32.totalorder %v324, %v771
        %vm801 = vcmp.eq.s32.totalorder %v325, %v771
        %vm802 = vcmp.eq.s32.totalorder %v326, %v771
        %vm803 = vcmp.eq.s32.totalorder %v327, %v771
        %v804 = vsel %vm772, 1.0, 0.0
        %v805 = vsel %vm773, 1.0, 0.0
        %v806 = vsel %vm774, 1.0, 0.0
        %v807 = vsel %vm775, 1.0, 0.0
        %v808 = vsel %vm776, 1.0, 0.0
        %v809 = vsel %vm777, 1.0, 0.0
        %v810 = vsel %vm778, 1.0, 0.0
        %v811 = vsel %vm779, 1.0, 0.0
        %v812 = vsel %vm780, 1.0, 0.0
        %v813 = vsel %vm781, 1.0, 0.0
        %v814 = vsel %vm782, 1.0, 0.0
        %v815 = vsel %vm783, 1.0, 0.0
        %v816 = vsel %vm784, 1.0, 0.0
        %v817 = vsel %vm785, 1.0, 0.0
        %v818 = vsel %vm786, 1.0, 0.0
        %v819 = vsel %vm787, 1.0, 0.0
        %v820 = vsel %vm788, 1.0, 0.0
        %v821 = vsel %vm789, 1.0, 0.0
        %v822 = vsel %vm790, 1.0, 0.0
        %v823 = vsel %vm791, 1.0, 0.0
        %v824 = vsel %vm792, 1.0, 0.0
        %v825 = vsel %vm793, 1.0, 0.0
        %v826 = vsel %vm794, 1.0, 0.0
        %v827 = vsel %vm795, 1.0, 0.0
        %v828 = vsel %vm796, 1.0, 0.0
        %v829 = vsel %vm797, 1.0, 0.0
        %v830 = vsel %vm798, 1.0, 0.0
        %v831 = vsel %vm799, 1.0, 0.0
        %v832 = vsel %vm800, 1.0, 0.0
        %v833 = vsel %vm801, 1.0, 0.0
        %v834 = vsel %vm802, 1.0, 0.0
        %v835 = vsel %vm803, 1.0, 0.0
        %v836 = vpack.c.bf16 %v805, %v804
        %v837 = vpack.c.bf16 %v807, %v806
        %v838 = vpack.c.bf16 %v809, %v808
        %v839 = vpack.c.bf16 %v811, %v810
        %v840 = vpack.c.bf16 %v813, %v812
        %v841 = vpack.c.bf16 %v815, %v814
        %v842 = vpack.c.bf16 %v817, %v816
        %v843 = vpack.c.bf16 %v819, %v818
        %v844 = vpack.c.bf16 %v821, %v820
        %v845 = vpack.c.bf16 %v823, %v822
        %v846 = vpack.c.bf16 %v825, %v824
        %v847 = vpack.c.bf16 %v827, %v826
        %v848 = vpack.c.bf16 %v829, %v828
        %v849 = vpack.c.bf16 %v831, %v830
        %v850 = vpack.c.bf16 %v833, %v832
        %v851 = vpack.c.bf16 %v835, %v834
        %852 = vmatprep.subr.bf16.mxu0 0
        %853 = vmatpush1.bf16.msra.mxu0 %v836
        %854 = vmatprep.subr.bf16.mxu0 0
        %855 = vmatpush1.bf16.msra.mxu0 %v837
        %856 = vmatprep.subr.bf16.mxu0 0
        %857 = vmatpush1.bf16.msra.mxu0 %v838
        %858 = vmatprep.subr.bf16.mxu0 0
        %859 = vmatpush1.bf16.msra.mxu0 %v839
        %860 = vmatprep.subr.bf16.mxu0 0
        %861 = vmatpush1.bf16.msra.mxu0 %v840
        %862 = vmatprep.subr.bf16.mxu0 0
        %863 = vmatpush1.bf16.msra.mxu0 %v841
        %864 = vmatprep.subr.bf16.mxu0 0
        %865 = vmatpush1.bf16.msra.mxu0 %v842
        %866 = vmatprep.subr.bf16.mxu0 0
        %867 = vmatpush1.bf16.msra.mxu0 %v843
        %868 = vmatprep.subr.bf16.mxu0 0
        %869 = vmatpush1.bf16.msra.mxu0 %v844
        %870 = vmatprep.subr.bf16.mxu0 0
        %871 = vmatpush1.bf16.msra.mxu0 %v845
        %872 = vmatprep.subr.bf16.mxu0 0
        %873 = vmatpush1.bf16.msra.mxu0 %v846
        %874 = vmatprep.subr.bf16.mxu0 0
        %875 = vmatpush1.bf16.msra.mxu0 %v847
        %876 = vmatprep.subr.bf16.mxu0 0
        %877 = vmatpush1.bf16.msra.mxu0 %v848
        %878 = vmatprep.subr.bf16.mxu0 0
        %879 = vmatpush1.bf16.msra.mxu0 %v849
        %880 = vmatprep.subr.bf16.mxu0 0
        %881 = vmatpush1.bf16.msra.mxu0 %v850
        %882 = vmatprep.subr.bf16.mxu0 0
        %883 = vmatpush1.bf16.msra.mxu0 %v851
        %884 = vmatprep.mubr.bf16.mxu0 %v286
        %885 = vmatmul.mubr.bf16.gmra.mrb[0].mxu0 %v285
        %v886 = vpop.f32.mrb[0].mxu0
        %v887 = vadd.f32 0.0, %v886
        %v888 = vpop.f32.mrb[0].mxu0
        %v889 = vpop.f32.mrb[0].mxu0
        %v890 = vpop.f32.mrb[0].mxu0
        %891 = vdwg.mxu0
        %v893 = vlaneseq
        %v894 = vshrl.u32 %v893, 7
        %v895 = vsub.s32 0, %v894
        %v896 = vrot.slane %v371, %v895
        %v898 = vmul.f32 %v887, %v896
        %v899 = vadd.f32 %v767, %v898
        %900 = vst [vmem:[%s271] sm:$0x3] %v899
        %s901 = sand.u32 %s127, 1
        %s902 = scalar_lea.sflag [#allocation4], %s901
        %s903 = sand.u32 %s127, 1
        %s904 = smul.addr %s903, 2
        %s905 = scalar_lea.vmem [#allocation8], %s904
        // Predicated region
        $region45: #{sample_flow.1} parent=31 // pred_check
          %p906 = pneg %p137
        $region46: #{sample_flow.1} parent=31 // pred_check_branch
          %908 = sbr.rel (%p906) target = $region48
        $region47: #{sample_flow.1} parent=31 // pred_region
          %s910 = ssub.s32 32, 32
          %911 = vsyncadd %s902, %s910
          %s912 = sadd.s32 %s28, %s27
          %s913 = smul.addr %s912, 32
          %s914 = scalar_lea.hbm %s3, %s913
          %s916 = sshll.u32 %s905, 4
          %s917 = int_to_ptr.vmem [resolvable:$true] %s916
          %919 = dma.vmem_to_hbm [thread:$0]  %s917, 32, %s914, %s902
        $region48: #{sample_flow.1} parent=31 // pred_fallthru
          _
      $region32: #{sample_flow.1} parent=5 // pred_fallthru
        _
      %p920 = scmp.le.s32.totalorder 2, %s18
      // Predicated region
      $region49: #{sample_flow.1} parent=5 // pred_check
        %p921 = pneg %p920
      $region50: #{sample_flow.1} parent=5 // pred_check_branch
        %923 = sbr.rel (%p921) target = $region52
      $region51: #{sample_flow.1} parent=5 // pred_region
        %s924 = ssub.s32 %s18, 2
        // Predicated region
        $region53: #{sample_flow.1} parent=51 // pred_check
          %p925 = pneg %p143
        $region54: #{sample_flow.1} parent=51 // pred_check_branch
          %927 = sbr.rel (%p925) target = $region56
        $region55: #{sample_flow.1} parent=51 // pred_region
          %s928 = sand.u32 %s128, 1
          %s929 = scalar_lea.sflag [#allocation4], %s928
          %s930 = sand.u32 %s128, 1
          %s931 = smul.addr %s930, 2
          %s932 = scalar_lea.vmem [#allocation8], %s931
          %933 = dma.done %s929, 32
        $region56: #{sample_flow.1} parent=51 // pred_fallthru
          _
      $region52: #{sample_flow.1} parent=5 // pred_fallthru
        _
    $region6: #{sample_flow.1} parent=1 // loop_footer
      %s22 = sadd.s32 1, %s18
    $region7: #{sample_flow.1} parent=1 // loop_footer_branch
      %17 = sbr.rel target = $region3
    $region8: #{sample_flow.1} parent=1 // loop_exit
      _
    %934 = vsyncpa [#allocation3], 1
    %s935 = scalar_lea.sflag [#allocation3], 1
    %936 = vsyncpa %s935, 1
    %937 = vsyncpa [#allocation6], 1
    %s938 = scalar_lea.sflag [#allocation6], 1
    %939 = vsyncpa %s938, 1
    %940 = vsyncpa [#allocation4], 1
    %s941 = scalar_lea.sflag [#allocation4], 1
    %942 = vsyncpa %s941, 1

</llo_original>
